<compile_context>
chip_gen: v5e
topology: v5e:2x2
jax: 0.10.0
libtpu: 0.0.40
codegen_flags: <defaults>
</compile_context>

<pallas_src>
import numpy as np
import jax
import jax.numpy as jnp
from jax.experimental import pallas as pl
from jax.experimental.pallas import tpu as pltpu

_EPS = 1e-5  # BatchNorm2d default eps


# --------------------------------------------------------------------------------------
# Architecture reconstruction (mirrors Decoder.__init__)
# --------------------------------------------------------------------------------------
def _decoder_arch(image_size, nf, nc=3, hidden_size=None):
    deconvs = [dict(cin=nf, cout=nc, k=4, s=2, p=1)]   # final CT (followed by Tanh)
    s = image_size
    f = nf
    while True:
        s = s / 2
        if s > 4:
            deconvs.append(dict(cin=f * 2, cout=f, k=4, s=2, p=1))
        else:
            if hidden_size is None:
                hidden_size = int(f)
            deconvs.append(dict(cin=hidden_size, cout=f, k=int(s), s=1, p=0))
            break
        f = f * 2
    deconvs.reverse()   # execution order: hidden -> ... -> image
    return deconvs, hidden_size


# --------------------------------------------------------------------------------------
# Host-side parameter preparation
# --------------------------------------------------------------------------------------
def _ct_dense_matrix(w_ct, h_in, stride, pad):
    """Dense matrix M such that  y_flat = x_flat @ M  reproduces ConvTranspose2d.

    x_flat is the (Cin, Hin, Win)-row-major flattening of one batch element,
    y_flat the (Cout, Hout, Wout)-row-major flattening of the output.
    ConvTranspose2d scatter rule:  oh = ih*stride - pad + kh  (same for w-axis),
    weight layout (Cin, Cout, kH, kW) as in PyTorch.
    """
    cin, cout, k, _ = w_ct.shape
    h_out = (h_in - 1) * stride - 2 * pad + k
    m = np.zeros((cin, h_in, h_in, cout, h_out, h_out), np.float32)
    for ih in range(h_in):
        for kh in range(k):
            oh = ih * stride - pad + kh
            if oh < 0 or oh >= h_out:
                continue
            for iw in range(h_in):
                for kw in range(k):
                    ow = iw * stride - pad + kw
                    if ow < 0 or ow >= h_out:
                        continue
                    m[:, ih, iw, :, oh, ow] += w_ct[:, :, kh, kw]
    return m.reshape(cin * h_in * h_in, cout * h_out * h_out), h_out


def init_decoder_params(key, image_size, nf, nc=3, hidden_size=None):
    arch, hidden = _decoder_arch(image_size, nf, nc, hidden_size)
    layers = []
    h_in = 1
    for i, spec in enumerate(arch):
        key, kw, kg, kb = jax.random.split(key, 4)
        cin, cout, k, s, p = spec["cin"], spec["cout"], spec["k"], spec["s"], spec["p"]
        w_ct = 0.1 * jax.random.normal(kw, (cin, cout, k, k), jnp.float32)
        m, h_out = _ct_dense_matrix(np.asarray(w_ct), h_in, s, p)
        layer = dict(
            m=jnp.asarray(m, jnp.bfloat16),          # bf16 MXU operand
            cout=cout, h_out=h_out, hw=h_out * h_out,
            w_raw=w_ct, stride=s, pad=p, gamma_raw=None, beta_raw=None,
        )
        if i < len(arch) - 1:                        # every CT but the last has BN + ReLU
            hw = h_out * h_out
            gamma = 1.0 + 0.1 * jax.random.normal(kg, (cout,), jnp.float32)
            beta = 0.1 * jax.random.normal(kb, (cout,), jnp.float32)
            # per-channel pooling matrix: pool[(c*hw + s), c] = 1
            pool = np.kron(np.eye(cout, dtype=np.float32), np.ones((hw, 1), np.float32))
            layer.update(
                pool=jnp.asarray(pool),                           # (C*HW, C)
                poolt=jnp.asarray(np.ascontiguousarray(pool.T)),  # (C, C*HW)
                gamma_cols=jnp.repeat(gamma, hw)[None, :],        # (1, C*HW)
                beta_cols=jnp.repeat(beta, hw)[None, :],          # (1, C*HW)
                gamma_raw=gamma, beta_raw=beta,
            )
        layers.append(layer)
        h_in = h_out
    return layers, hidden


# --------------------------------------------------------------------------------------
# Fused Pallas kernel: all decoder stages in one call, activations stay in VMEM
# --------------------------------------------------------------------------------------
def _make_fused_decoder_kernel(num_layers, hw_list, batch):
    def kernel(*refs):
        z_ref = refs[0]
        o_ref = refs[-1]
        x = z_ref[...]                      # (B, Cin0) f32
        idx = 1
        for i in range(num_layers):
            m_ref = refs[idx]
            idx += 1
            # Transposed conv i as ONE lane-dense matmul:
            #   (B, Cin*Hin*Win) @ (Cin*Hin*Win, Cout*Hout*Wout), bf16 in, f32 accumulate.
            y = jnp.dot(x.astype(jnp.bfloat16), m_ref[...],
                        preferred_element_type=jnp.float32)
            if i < num_layers - 1:
                pool_ref, poolt_ref, g_ref, b_ref = refs[idx:idx + 4]
                idx += 4
                inv_n = 1.0 / float(batch * hw_list[i])
                # BatchNorm2d, training-mode batch statistics (biased variance), all f32.
                # Per-channel sums via a tiny pooling matmul; broadcast back via its
                # transpose (avoids any lane<->sublane reshape inside the kernel).
                mean_c = jnp.dot(jnp.sum(y, axis=0, keepdims=True), pool_ref[...],
                                 preferred_element_type=jnp.float32) * inv_n      # (1, C)
                mean_cols = jnp.dot(mean_c, poolt_ref[...],
                                    preferred_element_type=jnp.float32)           # (1, C*HW)
                d = y - mean_cols
                var_c = jnp.dot(jnp.sum(d * d, axis=0, keepdims=True), pool_ref[...],
                                preferred_element_type=jnp.float32) * inv_n       # (1, C)
                inv_cols = jnp.dot(jax.lax.rsqrt(var_c + _EPS), poolt_ref[...],
                                   preferred_element_type=jnp.float32)            # (1, C*HW)
                x = jnp.maximum(d * inv_cols * g_ref[...] + b_ref[...], 0.0)      # ReLU
            else:
                o_ref[...] = jnp.tanh(y)    # final Tanh, (B, Cout*H*W) lane-dense store
    return kernel


def decoder_forward(z, layers):
    batch = z.shape[0]
    n = len(layers)
    hw_list = [l["hw"] for l in layers]

    args = [z]
    for i, l in enumerate(layers):
        args.append(l["m"])
        if i < n - 1:
            args.extend([l["pool"], l["poolt"], l["gamma_cols"], l["beta_cols"]])

    cout, h_out = layers[-1]["cout"], layers[-1]["h_out"]
    vmem = lambda: pl.BlockSpec(memory_space=pltpu.MemorySpace.VMEM)
    flat = pl.pallas_call(
        _make_fused_decoder_kernel(n, hw_list, batch),
        out_shape=jax.ShapeDtypeStruct((batch, cout * h_out * h_out), jnp.float32),
        in_specs=[vmem() for _ in args],
        out_specs=vmem(),
    )(*args)
    # (B, C*H*W) row-major IS NCHW after reshape -> no transpose needed.
    return flat.reshape(batch, cout, h_out, h_out)


# --------------------------------------------------------------------------------------
# Pure-JAX f32 reference (dilate/pad/flipped-conv formulation) -- validation only
# --------------------------------------------------------------------------------------
def _reference_forward(z, layers):
    x = z[:, :, None, None].astype(jnp.float32)
    n = len(layers)
    for i, l in enumerate(layers):
        w, s, p = l["w_raw"], l["stride"], l["pad"]
        cin, cout, k, _ = w.shape
        b, _, h_in, _ = x.shape
        h_out = (h_in - 1) * s - 2 * p + k
        up_len = (h_in - 1) * s + 1
        up = jnp.zeros((b, cin, up_len, up_len), jnp.float32).at[:, :, ::s, ::s].set(x)
        q = k - 1 - p
        xp = jnp.pad(up, ((0, 0), (0, 0), (q, q), (q, q)))
        wf = jnp.flip(w, (2, 3))
        y = jnp.zeros((b, cout, h_out, h_out), jnp.float32)
        for kh in range(k):
            for kw in range(k):
                patch = xp[:, :, kh:kh + h_out, kw:kw + h_out]
                y = y + jnp.einsum("bchw,cd->bdhw", patch, wf[:, :, kh, kw])
        if i < n - 1:
            mean = y.mean(axis=(0, 2, 3), keepdims=True)
            var = ((y - mean) ** 2).mean(axis=(0, 2, 3), keepdims=True)
            y = (y - mean) * jax.lax.rsqrt(var + _EPS)
            y = y * l["gamma_raw"][None, :, None, None] + l["beta_raw"][None, :, None, None]
            y = jnp.maximum(y, 0.0)
        else:
            y = jnp.tanh(y)
        x = y
    return x


if __name__ == "__main__":
    image_size, nf, nc, batch = 16, 8, 3, 2
    key = jax.random.PRNGKey(0)
    k_params, k_z = jax.random.split(key)
    layers, hidden = init_decoder_params(k_params, image_size, nf, nc)   # hidden == 16
    z = jax.random.normal(k_z, (batch, hidden), jnp.float32)

    out = jax.block_until_ready(decoder_forward(z, layers))

    assert out.shape == (batch, nc, image_size, image_size), out.shape
    assert bool(jnp.all(jnp.isfinite(out)))
    assert bool(jnp.all(jnp.abs(out) <= 1.0))          # tanh output range

    # Cross-check against an independent pure-JAX f32 reference (kernel uses bf16 MXU
    # operands with f32 accumulation, so allow a small tolerance).
    ref = jax.block_until_ready(_reference_forward(z, layers))
    max_err = float(jnp.max(jnp.abs(out - ref)))
    assert max_err < 0.15, f"mismatch vs reference: {max_err}"

    print("KERNEL_OK")
</pallas_src>

<mosaic_0001>
module attributes {stable_mosaic.version = 11 : i64} {
  func.func @kernel(%arg0: memref<2x16xf32, #tpu.memory_space<vmem>>, %arg1: memref<16x256xbf16, #tpu.memory_space<vmem>>, %arg2: memref<256x16xf32, #tpu.memory_space<vmem>>, %arg3: memref<16x256xf32, #tpu.memory_space<vmem>>, %arg4: memref<1x256xf32, #tpu.memory_space<vmem>>, %arg5: memref<1x256xf32, #tpu.memory_space<vmem>>, %arg6: memref<256x512xbf16, #tpu.memory_space<vmem>>, %arg7: memref<512x8xf32, #tpu.memory_space<vmem>>, %arg8: memref<8x512xf32, #tpu.memory_space<vmem>>, %arg9: memref<1x512xf32, #tpu.memory_space<vmem>>, %arg10: memref<1x512xf32, #tpu.memory_space<vmem>>, %arg11: memref<512x768xbf16, #tpu.memory_space<vmem>>, %arg12: memref<2x768xf32, #tpu.memory_space<vmem>>) attributes {dimension_semantics = [], scalar_prefetch = 0 : i64, scratch_operands = 0 : i64, tpu.core_type = #tpu.core_type<tc>} {
    %c0 = arith.constant 0 : index
    %c0_0 = arith.constant 0 : index
    %0 = vector.load %arg0[%c0, %c0_0] : memref<2x16xf32, #tpu.memory_space<vmem>>, vector<2x16xf32>
    %1 = arith.truncf %0 : vector<2x16xf32> to vector<2x16xbf16>
    %c0_1 = arith.constant 0 : index
    %c0_2 = arith.constant 0 : index
    %2 = vector.load %arg1[%c0_1, %c0_2] : memref<16x256xbf16, #tpu.memory_space<vmem>>, vector<16x256xbf16>
    %cst = arith.constant dense<0.000000e+00> : vector<2x256xf32>
    %3 = tpu.matmul %1, %2, %cst {dimension_numbers = #tpu.dot_dimension_numbers<[1], [0], [0], [1], [0, 0, 1, 1], [], []>} : vector<2x16xbf16>, vector<16x256xbf16>, vector<2x256xf32> -> vector<2x256xf32>
    %cst_3 = arith.constant dense<0.000000e+00> : vector<256xf32>
    %4 = vector.multi_reduction <add>, %3, %cst_3 [0] : vector<2x256xf32> to vector<256xf32>
    %5 = vector.shape_cast %4 : vector<256xf32> to vector<1x256xf32>
    %c0_4 = arith.constant 0 : index
    %c0_5 = arith.constant 0 : index
    %6 = vector.load %arg2[%c0_4, %c0_5] : memref<256x16xf32, #tpu.memory_space<vmem>>, vector<256x16xf32>
    %cst_6 = arith.constant dense<0.000000e+00> : vector<1x16xf32>
    %7 = tpu.matmul %5, %6, %cst_6 {dimension_numbers = #tpu.dot_dimension_numbers<[1], [0], [0], [1], [0, 0, 1, 1], [], []>} : vector<1x256xf32>, vector<256x16xf32>, vector<1x16xf32> -> vector<1x16xf32>
    %cst_7 = arith.constant 3.125000e-02 : f32
    %8 = vector.broadcast %cst_7 : f32 to vector<1x16xf32>
    %9 = arith.mulf %7, %8 : vector<1x16xf32>
    %c0_8 = arith.constant 0 : index
    %c0_9 = arith.constant 0 : index
    %10 = vector.load %arg3[%c0_8, %c0_9] : memref<16x256xf32, #tpu.memory_space<vmem>>, vector<16x256xf32>
    %cst_10 = arith.constant dense<0.000000e+00> : vector<1x256xf32>
    %11 = tpu.matmul %9, %10, %cst_10 {dimension_numbers = #tpu.dot_dimension_numbers<[1], [0], [0], [1], [0, 0, 1, 1], [], []>} : vector<1x16xf32>, vector<16x256xf32>, vector<1x256xf32> -> vector<1x256xf32>
    %12 = vector.broadcast %11 : vector<1x256xf32> to vector<2x256xf32>
    %13 = arith.subf %3, %12 : vector<2x256xf32>
    %14 = arith.mulf %13, %13 : vector<2x256xf32>
    %cst_11 = arith.constant dense<0.000000e+00> : vector<256xf32>
    %15 = vector.multi_reduction <add>, %14, %cst_11 [0] : vector<2x256xf32> to vector<256xf32>
    %16 = vector.shape_cast %15 : vector<256xf32> to vector<1x256xf32>
    %c0_12 = arith.constant 0 : index
    %c0_13 = arith.constant 0 : index
    %17 = vector.load %arg2[%c0_12, %c0_13] : memref<256x16xf32, #tpu.memory_space<vmem>>, vector<256x16xf32>
    %cst_14 = arith.constant dense<0.000000e+00> : vector<1x16xf32>
    %18 = tpu.matmul %16, %17, %cst_14 {dimension_numbers = #tpu.dot_dimension_numbers<[1], [0], [0], [1], [0, 0, 1, 1], [], []>} : vector<1x256xf32>, vector<256x16xf32>, vector<1x16xf32> -> vector<1x16xf32>
    %cst_15 = arith.constant 3.125000e-02 : f32
    %19 = vector.broadcast %cst_15 : f32 to vector<1x16xf32>
    %20 = arith.mulf %18, %19 : vector<1x16xf32>
    %cst_16 = arith.constant 9.99999974E-6 : f32
    %21 = vector.broadcast %cst_16 : f32 to vector<1x16xf32>
    %22 = arith.addf %20, %21 : vector<1x16xf32>
    %23 = math.rsqrt %22 : vector<1x16xf32>
    %c0_17 = arith.constant 0 : index
    %c0_18 = arith.constant 0 : index
    %24 = vector.load %arg3[%c0_17, %c0_18] : memref<16x256xf32, #tpu.memory_space<vmem>>, vector<16x256xf32>
    %cst_19 = arith.constant dense<0.000000e+00> : vector<1x256xf32>
    %25 = tpu.matmul %23, %24, %cst_19 {dimension_numbers = #tpu.dot_dimension_numbers<[1], [0], [0], [1], [0, 0, 1, 1], [], []>} : vector<1x16xf32>, vector<16x256xf32>, vector<1x256xf32> -> vector<1x256xf32>
    %26 = vector.broadcast %25 : vector<1x256xf32> to vector<2x256xf32>
    %27 = arith.mulf %13, %26 : vector<2x256xf32>
    %c0_20 = arith.constant 0 : index
    %c0_21 = arith.constant 0 : index
    %28 = vector.load %arg4[%c0_20, %c0_21] : memref<1x256xf32, #tpu.memory_space<vmem>>, vector<1x256xf32>
    %29 = vector.broadcast %28 : vector<1x256xf32> to vector<2x256xf32>
    %30 = arith.mulf %27, %29 : vector<2x256xf32>
    %c0_22 = arith.constant 0 : index
    %c0_23 = arith.constant 0 : index
    %31 = vector.load %arg5[%c0_22, %c0_23] : memref<1x256xf32, #tpu.memory_space<vmem>>, vector<1x256xf32>
    %32 = vector.broadcast %31 : vector<1x256xf32> to vector<2x256xf32>
    %33 = arith.addf %30, %32 : vector<2x256xf32>
    %cst_24 = arith.constant 0.000000e+00 : f32
    %34 = vector.broadcast %cst_24 : f32 to vector<2x256xf32>
    %35 = arith.maximumf %33, %34 : vector<2x256xf32>
    %36 = arith.truncf %35 : vector<2x256xf32> to vector<2x256xbf16>
    %c0_25 = arith.constant 0 : index
    %c0_26 = arith.constant 0 : index
    %37 = vector.load %arg6[%c0_25, %c0_26] : memref<256x512xbf16, #tpu.memory_space<vmem>>, vector<256x512xbf16>
    %cst_27 = arith.constant dense<0.000000e+00> : vector<2x512xf32>
    %38 = tpu.matmul %36, %37, %cst_27 {dimension_numbers = #tpu.dot_dimension_numbers<[1], [0], [0], [1], [0, 0, 1, 1], [], []>} : vector<2x256xbf16>, vector<256x512xbf16>, vector<2x512xf32> -> vector<2x512xf32>
    %cst_28 = arith.constant dense<0.000000e+00> : vector<512xf32>
    %39 = vector.multi_reduction <add>, %38, %cst_28 [0] : vector<2x512xf32> to vector<512xf32>
    %40 = vector.shape_cast %39 : vector<512xf32> to vector<1x512xf32>
    %c0_29 = arith.constant 0 : index
    %c0_30 = arith.constant 0 : index
    %41 = vector.load %arg7[%c0_29, %c0_30] : memref<512x8xf32, #tpu.memory_space<vmem>>, vector<512x8xf32>
    %cst_31 = arith.constant dense<0.000000e+00> : vector<1x8xf32>
    %42 = tpu.matmul %40, %41, %cst_31 {dimension_numbers = #tpu.dot_dimension_numbers<[1], [0], [0], [1], [0, 0, 1, 1], [], []>} : vector<1x512xf32>, vector<512x8xf32>, vector<1x8xf32> -> vector<1x8xf32>
    %cst_32 = arith.constant 7.812500e-03 : f32
    %43 = vector.broadcast %cst_32 : f32 to vector<1x8xf32>
    %44 = arith.mulf %42, %43 : vector<1x8xf32>
    %c0_33 = arith.constant 0 : index
    %c0_34 = arith.constant 0 : index
    %45 = vector.load %arg8[%c0_33, %c0_34] : memref<8x512xf32, #tpu.memory_space<vmem>>, vector<8x512xf32>
    %cst_35 = arith.constant dense<0.000000e+00> : vector<1x512xf32>
    %46 = tpu.matmul %44, %45, %cst_35 {dimension_numbers = #tpu.dot_dimension_numbers<[1], [0], [0], [1], [0, 0, 1, 1], [], []>} : vector<1x8xf32>, vector<8x512xf32>, vector<1x512xf32> -> vector<1x512xf32>
    %47 = vector.broadcast %46 : vector<1x512xf32> to vector<2x512xf32>
    %48 = arith.subf %38, %47 : vector<2x512xf32>
    %49 = arith.mulf %48, %48 : vector<2x512xf32>
    %cst_36 = arith.constant dense<0.000000e+00> : vector<512xf32>
    %50 = vector.multi_reduction <add>, %49, %cst_36 [0] : vector<2x512xf32> to vector<512xf32>
    %51 = vector.shape_cast %50 : vector<512xf32> to vector<1x512xf32>
    %c0_37 = arith.constant 0 : index
    %c0_38 = arith.constant 0 : index
    %52 = vector.load %arg7[%c0_37, %c0_38] : memref<512x8xf32, #tpu.memory_space<vmem>>, vector<512x8xf32>
    %cst_39 = arith.constant dense<0.000000e+00> : vector<1x8xf32>
    %53 = tpu.matmul %51, %52, %cst_39 {dimension_numbers = #tpu.dot_dimension_numbers<[1], [0], [0], [1], [0, 0, 1, 1], [], []>} : vector<1x512xf32>, vector<512x8xf32>, vector<1x8xf32> -> vector<1x8xf32>
    %cst_40 = arith.constant 7.812500e-03 : f32
    %54 = vector.broadcast %cst_40 : f32 to vector<1x8xf32>
    %55 = arith.mulf %53, %54 : vector<1x8xf32>
    %cst_41 = arith.constant 9.99999974E-6 : f32
    %56 = vector.broadcast %cst_41 : f32 to vector<1x8xf32>
    %57 = arith.addf %55, %56 : vector<1x8xf32>
    %58 = math.rsqrt %57 : vector<1x8xf32>
    %c0_42 = arith.constant 0 : index
    %c0_43 = arith.constant 0 : index
    %59 = vector.load %arg8[%c0_42, %c0_43] : memref<8x512xf32, #tpu.memory_space<vmem>>, vector<8x512xf32>
    %cst_44 = arith.constant dense<0.000000e+00> : vector<1x512xf32>
    %60 = tpu.matmul %58, %59, %cst_44 {dimension_numbers = #tpu.dot_dimension_numbers<[1], [0], [0], [1], [0, 0, 1, 1], [], []>} : vector<1x8xf32>, vector<8x512xf32>, vector<1x512xf32> -> vector<1x512xf32>
    %61 = vector.broadcast %60 : vector<1x512xf32> to vector<2x512xf32>
    %62 = arith.mulf %48, %61 : vector<2x512xf32>
    %c0_45 = arith.constant 0 : index
    %c0_46 = arith.constant 0 : index
    %63 = vector.load %arg9[%c0_45, %c0_46] : memref<1x512xf32, #tpu.memory_space<vmem>>, vector<1x512xf32>
    %64 = vector.broadcast %63 : vector<1x512xf32> to vector<2x512xf32>
    %65 = arith.mulf %62, %64 : vector<2x512xf32>
    %c0_47 = arith.constant 0 : index
    %c0_48 = arith.constant 0 : index
    %66 = vector.load %arg10[%c0_47, %c0_48] : memref<1x512xf32, #tpu.memory_space<vmem>>, vector<1x512xf32>
    %67 = vector.broadcast %66 : vector<1x512xf32> to vector<2x512xf32>
    %68 = arith.addf %65, %67 : vector<2x512xf32>
    %cst_49 = arith.constant 0.000000e+00 : f32
    %69 = vector.broadcast %cst_49 : f32 to vector<2x512xf32>
    %70 = arith.maximumf %68, %69 : vector<2x512xf32>
    %71 = arith.truncf %70 : vector<2x512xf32> to vector<2x512xbf16>
    %c0_50 = arith.constant 0 : index
    %c0_51 = arith.constant 0 : index
    %72 = vector.load %arg11[%c0_50, %c0_51] : memref<512x768xbf16, #tpu.memory_space<vmem>>, vector<512x768xbf16>
    %cst_52 = arith.constant dense<0.000000e+00> : vector<2x768xf32>
    %73 = tpu.matmul %71, %72, %cst_52 {dimension_numbers = #tpu.dot_dimension_numbers<[1], [0], [0], [1], [0, 0, 1, 1], [], []>} : vector<2x512xbf16>, vector<512x768xbf16>, vector<2x768xf32> -> vector<2x768xf32>
    %74 = math.tanh %73 : vector<2x768xf32>
    %c0_53 = arith.constant 0 : index
    %c0_54 = arith.constant 0 : index
    %75 = vector.load %arg12[%c0_53, %c0_54] : memref<2x768xf32, #tpu.memory_space<vmem>>, vector<2x768xf32>
    tpu.vector_store %arg12[%c0_53, %c0_54], %74 {strides = array<i32>} : memref<2x768xf32, #tpu.memory_space<vmem>>, vector<2x768xf32>,
    return
  }
}

</mosaic_0001>

<llo_original>
// kernel: tpu_custom_call.1
$region0: #{tpu_custom_call.1}
  #allocation0 [shape = 'u32[]', space=smem, size = 0x4, offset = 0x4, fixed_abs, tag = 'smem constant byte address 0x4 - core index']
  #allocation1 [shape = 'u32[72,128]{1,0:T(1,128)}', space=vmem, size = 0x9000, scoped, tag = 'internal scratch']
  %s0 = inlined_call_operand.vmem [shape: f32[2,16], index: 0, kind: input, shape index: {}]
  %s1 = inlined_call_operand.vmem [shape: bf16[16,256], index: 1, kind: input, shape index: {}]
  %s2 = inlined_call_operand.vmem [shape: f32[256,16], index: 2, kind: input, shape index: {}]
  %s3 = inlined_call_operand.vmem [shape: f32[16,256], index: 3, kind: input, shape index: {}]
  %s4 = inlined_call_operand.vmem [shape: f32[1,256], index: 4, kind: input, shape index: {}]
  %s5 = inlined_call_operand.vmem [shape: f32[1,256], index: 5, kind: input, shape index: {}]
  %s6 = inlined_call_operand.vmem [shape: bf16[256,512], index: 6, kind: input, shape index: {}]
  %s7 = inlined_call_operand.vmem [shape: f32[512,8], index: 7, kind: input, shape index: {}]
  %s8 = inlined_call_operand.vmem [shape: f32[8,512], index: 8, kind: input, shape index: {}]
  %s9 = inlined_call_operand.vmem [shape: f32[1,512], index: 9, kind: input, shape index: {}]
  %s10 = inlined_call_operand.vmem [shape: f32[1,512], index: 10, kind: input, shape index: {}]
  %s11 = inlined_call_operand.hbm [shape: bf16[512,768], index: 11, kind: input, shape index: {}]
  %s12 = inlined_call_operand.hbm [shape: f32[2,768], index: 12, kind: output, shape index: {}]
  %s13 = sld [smem:[#allocation0]]
  $region62: #{tpu_custom_call.1} parent=0
    _
  %s15 = ssub.s32 1, %s13
  %s16 = scalar_select 0, %s15, %s13
  $region1: #{tpu_custom_call.1} parent=0
    #allocation2 [shape = 'u8[786432]{0}', space=vmem, size = 0xc0000, scoped, tag = 'input window, operand 11, single buffered']
    #allocation3 [shape = 's32[1]{0}', space=sflag, size = 0x4, scoped, tag = 'scoped memory for tpu_custom_call.1']
    #allocation4 [shape = 's32[1]{0}', space=sflag, size = 0x4, scoped, tag = 'scoped memory for tpu_custom_call.1']
    #allocation5 [shape = 'u8[6144]{0}', space=vmem, size = 0x1800, scoped, tag = 'output window, operand 0, single buffered']
    %17 = vsyncpa [#allocation3], 0
    %18 = vsyncpa [#allocation4], 0
    // Predicated region
    $region2: #{tpu_custom_call.1} parent=1 // pred_check
      _
    $region3: #{tpu_custom_call.1} parent=1 // pred_check_branch
      %20 = sbr.rel (0) target = $region5
    $region4: #{tpu_custom_call.1} parent=1 // pred_region
      _
    $region5: #{tpu_custom_call.1} parent=1 // pred_fallthru
      _
    // Predicated region
    $region6: #{tpu_custom_call.1} parent=1 // pred_check
      _
    $region7: #{tpu_custom_call.1} parent=1 // pred_check_branch
      %22 = sbr.rel (0) target = $region9
    $region8: #{tpu_custom_call.1} parent=1 // pred_region
      _
    $region9: #{tpu_custom_call.1} parent=1 // pred_fallthru
      _
    // Predicated region
    $region10: #{tpu_custom_call.1} parent=1 // pred_check
      _
    $region11: #{tpu_custom_call.1} parent=1 // pred_check_branch
      %24 = sbr.rel (0) target = $region13
    $region12: #{tpu_custom_call.1} parent=1 // pred_region
      _
    $region13: #{tpu_custom_call.1} parent=1 // pred_fallthru
      _
    // Predicated region
    $region14: #{tpu_custom_call.1} parent=1 // pred_check
      _
    $region15: #{tpu_custom_call.1} parent=1 // pred_check_branch
      %26 = sbr.rel (0) target = $region17
    $region16: #{tpu_custom_call.1} parent=1 // pred_region
      _
    $region17: #{tpu_custom_call.1} parent=1 // pred_fallthru
      _
    // Predicated region
    $region18: #{tpu_custom_call.1} parent=1 // pred_check
      _
    $region19: #{tpu_custom_call.1} parent=1 // pred_check_branch
      %28 = sbr.rel (0) target = $region21
    $region20: #{tpu_custom_call.1} parent=1 // pred_region
      _
    $region21: #{tpu_custom_call.1} parent=1 // pred_fallthru
      _
    // Predicated region
    $region22: #{tpu_custom_call.1} parent=1 // pred_check
      _
    $region23: #{tpu_custom_call.1} parent=1 // pred_check_branch
      %30 = sbr.rel (0) target = $region25
    $region24: #{tpu_custom_call.1} parent=1 // pred_region
      _
    $region25: #{tpu_custom_call.1} parent=1 // pred_fallthru
      _
    // Predicated region
    $region26: #{tpu_custom_call.1} parent=1 // pred_check
      _
    $region27: #{tpu_custom_call.1} parent=1 // pred_check_branch
      %32 = sbr.rel (0) target = $region29
    $region28: #{tpu_custom_call.1} parent=1 // pred_region
      _
    $region29: #{tpu_custom_call.1} parent=1 // pred_fallthru
      _
    // Predicated region
    $region30: #{tpu_custom_call.1} parent=1 // pred_check
      _
    $region31: #{tpu_custom_call.1} parent=1 // pred_check_branch
      %34 = sbr.rel (0) target = $region33
    $region32: #{tpu_custom_call.1} parent=1 // pred_region
      _
    $region33: #{tpu_custom_call.1} parent=1 // pred_fallthru
      _
    // Predicated region
    $region34: #{tpu_custom_call.1} parent=1 // pred_check
      _
    $region35: #{tpu_custom_call.1} parent=1 // pred_check_branch
      %36 = sbr.rel (0) target = $region37
    $region36: #{tpu_custom_call.1} parent=1 // pred_region
      _
    $region37: #{tpu_custom_call.1} parent=1 // pred_fallthru
      _
    // Predicated region
    $region38: #{tpu_custom_call.1} parent=1 // pred_check
      _
    $region39: #{tpu_custom_call.1} parent=1 // pred_check_branch
      %38 = sbr.rel (0) target = $region41
    $region40: #{tpu_custom_call.1} parent=1 // pred_region
      _
    $region41: #{tpu_custom_call.1} parent=1 // pred_fallthru
      _
    // Predicated region
    $region42: #{tpu_custom_call.1} parent=1 // pred_check
      _
    $region43: #{tpu_custom_call.1} parent=1 // pred_check_branch
      %40 = sbr.rel (0) target = $region45
    $region44: #{tpu_custom_call.1} parent=1 // pred_region
      _
    $region45: #{tpu_custom_call.1} parent=1 // pred_fallthru
      _
    // Predicated region
    $region46: #{tpu_custom_call.1} parent=1 // pred_check
      _
    $region47: #{tpu_custom_call.1} parent=1 // pred_check_branch
      %42 = sbr.rel (0) target = $region49
    $region48: #{tpu_custom_call.1} parent=1 // pred_region
      %44 = vsyncadd [#allocation3], 0
      %s45 = sshll.u32 %s11, 4
      %s46 = int_to_ptr.hbm [resolvable:$true] %s45
      %s47 = sshll.u32 [#allocation2], 4
      %s48 = int_to_ptr.vmem [resolvable:$true] %s47
      %53 = dma.hbm_to_vmem [thread:$0]  %s46, 24576, %s48, [#allocation3], 384, 384, 24
    $region49: #{tpu_custom_call.1} parent=1 // pred_fallthru
      _
    // Predicated region
    $region50: #{tpu_custom_call.1} parent=1 // pred_check
      _
    $region51: #{tpu_custom_call.1} parent=1 // pred_check_branch
      %55 = sbr.rel (0) target = $region53
    $region52: #{tpu_custom_call.1} parent=1 // pred_region
      %57 = dma.done [#allocation3], 24576
    $region53: #{tpu_custom_call.1} parent=1 // pred_fallthru
      _
    %v59 = vld [vmem:[%s0] sm:$0x3]
    %v60 = vpack.c.bf16 %v59, %v59
    %v61 = vld [vmem:[%s1] sm:$0xff]
    %v62 = vld [vmem:[%s1 + $0x8] sm:$0xff]
    %v65 = vunpack.c.l.b16 %v61
    %v66 = vunpack.c.h.b16 %v61
    %v67 = vunpack.c.l.b16 %v62
    %v68 = vunpack.c.h.b16 %v62
    %v69 = vpack.c.b16 %v67, %v65
    %v70 = vpack.c.b16 %v68, %v66
    %vm73 = vcmask 130048
    %v75 = vsel %vm73, %v60, 0
    %77 = vmatpush.bf16.msra.mxu0 0
    %78 = vmatpush.bf16.msra.mxu0 0
    %79 = vmatpush.bf16.msra.mxu0 0
    %80 = vmatpush.bf16.msra.mxu0 0
    %81 = vmatpush.bf16.msra.mxu0 0
    %82 = vmatpush.bf16.msra.mxu0 0
    %83 = vmatpush.bf16.msra.mxu0 0
    %84 = vmatpush.bf16.msra.mxu0 %v69
    %85 = vmatmul.bf16.gmra.mxu0 %v75
    %v86 = vpop.f32.mrf.mxu0
    %v87 = vadd.f32 0.0, %v86
    %v88 = vpop.f32.mrf.mxu0
    %89 = vdwg.mxu0
    %90 = vmatpush.bf16.msra.mxu0 0
    %91 = vmatpush.bf16.msra.mxu0 0
    %92 = vmatpush.bf16.msra.mxu0 0
    %93 = vmatpush.bf16.msra.mxu0 0
    %94 = vmatpush.bf16.msra.mxu0 0
    %95 = vmatpush.bf16.msra.mxu0 0
    %96 = vmatpush.bf16.msra.mxu0 0
    %97 = vmatpush.bf16.msra.mxu0 %v70
    %98 = vmatmul.bf16.gmra.mxu0 %v75
    %v99 = vpop.f32.mrf.mxu0
    %v100 = vadd.f32 0.0, %v99
    %v101 = vpop.f32.mrf.mxu0
    %102 = vdwg.mxu0
    %vm103 = vcmask 1041408
    %v104 = vsel %vm103, %v87, 0.0
    %v105 = vrot.slane %v104, 4
    %v106 = vadd.f32 %v104, %v105
    %v107 = vrot.slane %v106, 2
    %v108 = vadd.f32 %v106, %v107
    %v109 = vrot.slane %v108, 1
    %v110 = vadd.f32 %v108, %v109
    %v111 = vsel %vm103, %v100, 0.0
    %v112 = vrot.slane %v111, 4
    %v113 = vadd.f32 %v111, %v112
    %v114 = vrot.slane %v113, 2
    %v115 = vadd.f32 %v113, %v114
    %v116 = vrot.slane %v115, 1
    %v117 = vadd.f32 %v115, %v116
    %v118 = vld [vmem:[%s2] sm:$0xff]
    %v119 = vld [vmem:[%s2 + $0x8] sm:$0xff]
    %v120 = vld [vmem:[%s2 + $0x10] sm:$0xff]
    %v121 = vld [vmem:[%s2 + $0x18] sm:$0xff]
    %v122 = vld [vmem:[%s2 + $0x20] sm:$0xff]
    %v123 = vld [vmem:[%s2 + $0x28] sm:$0xff]
    %v124 = vld [vmem:[%s2 + $0x30] sm:$0xff]
    %v125 = vld [vmem:[%s2 + $0x38] sm:$0xff]
    %v126 = vld [vmem:[%s2 + $0x40] sm:$0xff]
    %v127 = vld [vmem:[%s2 + $0x48] sm:$0xff]
    %v128 = vld [vmem:[%s2 + $0x50] sm:$0xff]
    %v129 = vld [vmem:[%s2 + $0x58] sm:$0xff]
    %v130 = vld [vmem:[%s2 + $0x60] sm:$0xff]
    %v131 = vld [vmem:[%s2 + $0x68] sm:$0xff]
    %v132 = vld [vmem:[%s2 + $0x70] sm:$0xff]
    %v133 = vld [vmem:[%s2 + $0x78] sm:$0xff]
    %v134 = vld [vmem:[%s2 + $0x80] sm:$0xff]
    %v135 = vld [vmem:[%s2 + $0x88] sm:$0xff]
    %v136 = vld [vmem:[%s2 + $0x90] sm:$0xff]
    %v137 = vld [vmem:[%s2 + $0x98] sm:$0xff]
    %v138 = vld [vmem:[%s2 + $0xa0] sm:$0xff]
    %v139 = vld [vmem:[%s2 + $0xa8] sm:$0xff]
    %v140 = vld [vmem:[%s2 + $0xb0] sm:$0xff]
    %v141 = vld [vmem:[%s2 + $0xb8] sm:$0xff]
    %v142 = vld [vmem:[%s2 + $0xc0] sm:$0xff]
    %v143 = vld [vmem:[%s2 + $0xc8] sm:$0xff]
    %v144 = vld [vmem:[%s2 + $0xd0] sm:$0xff]
    %v145 = vld [vmem:[%s2 + $0xd8] sm:$0xff]
    %v146 = vld [vmem:[%s2 + $0xe0] sm:$0xff]
    %v147 = vld [vmem:[%s2 + $0xe8] sm:$0xff]
    %v148 = vld [vmem:[%s2 + $0xf0] sm:$0xff]
    %v149 = vld [vmem:[%s2 + $0xf8] sm:$0xff]
    %150 = vmatpush.msra.mxu0 %v133
    %151 = vmatpush.msra.mxu0 %v132
    %152 = vmatpush.msra.mxu0 %v131
    %153 = vmatpush.msra.mxu0 %v130
    %154 = vmatpush.msra.mxu0 %v129
    %155 = vmatpush.msra.mxu0 %v128
    %156 = vmatpush.msra.mxu0 %v127
    %157 = vmatpush.msra.mxu0 %v126
    %158 = vmatpush.msra.mxu0 %v125
    %159 = vmatpush.msra.mxu0 %v124
    %160 = vmatpush.msra.mxu0 %v123
    %161 = vmatpush.msra.mxu0 %v122
    %162 = vmatpush.msra.mxu0 %v121
    %163 = vmatpush.msra.mxu0 %v120
    %164 = vmatpush.msra.mxu0 %v119
    %165 = vmatpush.msra.mxu0 %v118
    %166 = vmatmul.f32.gmra.mxu0 %v110
    %v167 = vpop.f32.mrf.mxu0
    %v168 = vadd.f32 0.0, %v167
    %169 = vdwg.mxu0
    %170 = vmatpush.msra.mxu0 %v149
    %171 = vmatpush.msra.mxu0 %v148
    %172 = vmatpush.msra.mxu0 %v147
    %173 = vmatpush.msra.mxu0 %v146
    %174 = vmatpush.msra.mxu0 %v145
    %175 = vmatpush.msra.mxu0 %v144
    %176 = vmatpush.msra.mxu0 %v143
    %177 = vmatpush.msra.mxu0 %v142
    %178 = vmatpush.msra.mxu0 %v141
    %179 = vmatpush.msra.mxu0 %v140
    %180 = vmatpush.msra.mxu0 %v139
    %181 = vmatpush.msra.mxu0 %v138
    %182 = vmatpush.msra.mxu0 %v137
    %183 = vmatpush.msra.mxu0 %v136
    %184 = vmatpush.msra.mxu0 %v135
    %185 = vmatpush.msra.mxu0 %v134
    %186 = vmatmul.f32.gmra.mxu0 %v117
    %v187 = vpop.f32.mrf.mxu0
    %v188 = vadd.f32 %v168, %v187
    %189 = vdwg.mxu0
    %v190 = vmul.f32 %v188, 0.03125
    %v191 = vld [vmem:[%s3] sm:$0xff]
    %v192 = vld [vmem:[%s3 + $0x8] sm:$0xff]
    %v193 = vld [vmem:[%s3 + $0x10] sm:$0xff]
    %v194 = vld [vmem:[%s3 + $0x18] sm:$0xff]
    %v196 = vsel %vm73, %v190, 0
    %198 = vmatpush.msra.mxu0 0.0
    %199 = vmatpush.msra.mxu0 0.0
    %200 = vmatpush.msra.mxu0 0.0
    %201 = vmatpush.msra.mxu0 0.0
    %202 = vmatpush.msra.mxu0 0.0
    %203 = vmatpush.msra.mxu0 0.0
    %204 = vmatpush.msra.mxu0 0.0
    %205 = vmatpush.msra.mxu0 0.0
    %206 = vmatpush.msra.mxu0 0.0
    %207 = vmatpush.msra.mxu0 0.0
    %208 = vmatpush.msra.mxu0 0.0
    %209 = vmatpush.msra.mxu0 0.0
    %210 = vmatpush.msra.mxu0 0.0
    %211 = vmatpush.msra.mxu0 0.0
    %212 = vmatpush.msra.mxu0 %v193
    %213 = vmatpush.msra.mxu0 %v191
    %214 = vmatmul.f32.gmra.mxu0 %v196
    %v215 = vpop.f32.mrf.mxu0
    %v216 = vadd.f32 0.0, %v215
    %217 = vdwg.mxu0
    %218 = vmatpush.msra.mxu0 0.0
    %219 = vmatpush.msra.mxu0 0.0
    %220 = vmatpush.msra.mxu0 0.0
    %221 = vmatpush.msra.mxu0 0.0
    %222 = vmatpush.msra.mxu0 0.0
    %223 = vmatpush.msra.mxu0 0.0
    %224 = vmatpush.msra.mxu0 0.0
    %225 = vmatpush.msra.mxu0 0.0
    %226 = vmatpush.msra.mxu0 0.0
    %227 = vmatpush.msra.mxu0 0.0
    %228 = vmatpush.msra.mxu0 0.0
    %229 = vmatpush.msra.mxu0 0.0
    %230 = vmatpush.msra.mxu0 0.0
    %231 = vmatpush.msra.mxu0 0.0
    %232 = vmatpush.msra.mxu0 %v194
    %233 = vmatpush.msra.mxu0 %v192
    %234 = vmatmul.f32.gmra.mxu0 %v196
    %v235 = vpop.f32.mrf.mxu0
    %v236 = vadd.f32 0.0, %v235
    %237 = vdwg.mxu0
    %v238 = vperm.slane %v216, 0
    %v239 = vperm.slane %v236, 0
    %v240 = vsub.f32 %v87, %v238
    %v241 = vsub.f32 %v100, %v239
    %v242 = vmul.f32 %v240, %v240
    %v243 = vmul.f32 %v241, %v241
    %v244 = vsel %vm103, %v242, 0.0
    %v245 = vrot.slane %v244, 4
    %v246 = vadd.f32 %v244, %v245
    %v247 = vrot.slane %v246, 2
    %v248 = vadd.f32 %v246, %v247
    %v249 = vrot.slane %v248, 1
    %v250 = vadd.f32 %v248, %v249
    %v251 = vsel %vm103, %v243, 0.0
    %v252 = vrot.slane %v251, 4
    %v253 = vadd.f32 %v251, %v252
    %v254 = vrot.slane %v253, 2
    %v255 = vadd.f32 %v253, %v254
    %v256 = vrot.slane %v255, 1
    %v257 = vadd.f32 %v255, %v256
    %258 = vmatpush.msra.mxu0 %v133
    %259 = vmatpush.msra.mxu0 %v132
    %260 = vmatpush.msra.mxu0 %v131
    %261 = vmatpush.msra.mxu0 %v130
    %262 = vmatpush.msra.mxu0 %v129
    %263 = vmatpush.msra.mxu0 %v128
    %264 = vmatpush.msra.mxu0 %v127
    %265 = vmatpush.msra.mxu0 %v126
    %266 = vmatpush.msra.mxu0 %v125
    %267 = vmatpush.msra.mxu0 %v124
    %268 = vmatpush.msra.mxu0 %v123
    %269 = vmatpush.msra.mxu0 %v122
    %270 = vmatpush.msra.mxu0 %v121
    %271 = vmatpush.msra.mxu0 %v120
    %272 = vmatpush.msra.mxu0 %v119
    %273 = vmatpush.msra.mxu0 %v118
    %274 = vmatmul.f32.gmra.mxu0 %v250
    %v275 = vpop.f32.mrf.mxu0
    %v276 = vadd.f32 0.0, %v275
    %277 = vdwg.mxu0
    %278 = vmatpush.msra.mxu0 %v149
    %279 = vmatpush.msra.mxu0 %v148
    %280 = vmatpush.msra.mxu0 %v147
    %281 = vmatpush.msra.mxu0 %v146
    %282 = vmatpush.msra.mxu0 %v145
    %283 = vmatpush.msra.mxu0 %v144
    %284 = vmatpush.msra.mxu0 %v143
    %285 = vmatpush.msra.mxu0 %v142
    %286 = vmatpush.msra.mxu0 %v141
    %287 = vmatpush.msra.mxu0 %v140
    %288 = vmatpush.msra.mxu0 %v139
    %289 = vmatpush.msra.mxu0 %v138
    %290 = vmatpush.msra.mxu0 %v137
    %291 = vmatpush.msra.mxu0 %v136
    %292 = vmatpush.msra.mxu0 %v135
    %293 = vmatpush.msra.mxu0 %v134
    %294 = vmatmul.f32.gmra.mxu0 %v257
    %v295 = vpop.f32.mrf.mxu0
    %v296 = vadd.f32 %v276, %v295
    %297 = vdwg.mxu0
    %v298 = vmul.f32 %v296, 0.03125
    %v299 = vadd.f32 %v298, 1e-05
    %v300 = vrsqrt.pop %v299
    %v301 = vmul.f32 %v300, %v299
    %v302 = vmul.f32 %v301, %v300
    %v303 = vmul.f32 0.5, %v302
    %v304 = vsub.f32 1.5, %v303
    %v305 = vmul.f32 %v300, %v304
    %vm306 = vweird.f32 %v299
    %vm307 = vweird.f32 %v300
    %vm308 = vmor %vm306, %vm307
    %v309 = vsel %vm308, %v300, %v305
    %v311 = vsel %vm73, %v309, 0
    %313 = vmatpush.msra.mxu0 0.0
    %314 = vmatpush.msra.mxu0 0.0
    %315 = vmatpush.msra.mxu0 0.0
    %316 = vmatpush.msra.mxu0 0.0
    %317 = vmatpush.msra.mxu0 0.0
    %318 = vmatpush.msra.mxu0 0.0
    %319 = vmatpush.msra.mxu0 0.0
    %320 = vmatpush.msra.mxu0 0.0
    %321 = vmatpush.msra.mxu0 0.0
    %322 = vmatpush.msra.mxu0 0.0
    %323 = vmatpush.msra.mxu0 0.0
    %324 = vmatpush.msra.mxu0 0.0
    %325 = vmatpush.msra.mxu0 0.0
    %326 = vmatpush.msra.mxu0 0.0
    %327 = vmatpush.msra.mxu0 %v193
    %328 = vmatpush.msra.mxu0 %v191
    %329 = vmatmul.f32.gmra.mxu0 %v311
    %v330 = vpop.f32.mrf.mxu0
    %v331 = vadd.f32 0.0, %v330
    %332 = vdwg.mxu0
    %333 = vmatpush.msra.mxu0 0.0
    %334 = vmatpush.msra.mxu0 0.0
    %335 = vmatpush.msra.mxu0 0.0
    %336 = vmatpush.msra.mxu0 0.0
    %337 = vmatpush.msra.mxu0 0.0
    %338 = vmatpush.msra.mxu0 0.0
    %339 = vmatpush.msra.mxu0 0.0
    %340 = vmatpush.msra.mxu0 0.0
    %341 = vmatpush.msra.mxu0 0.0
    %342 = vmatpush.msra.mxu0 0.0
    %343 = vmatpush.msra.mxu0 0.0
    %344 = vmatpush.msra.mxu0 0.0
    %345 = vmatpush.msra.mxu0 0.0
    %346 = vmatpush.msra.mxu0 0.0
    %347 = vmatpush.msra.mxu0 %v194
    %348 = vmatpush.msra.mxu0 %v192
    %349 = vmatmul.f32.gmra.mxu0 %v311
    %v350 = vpop.f32.mrf.mxu0
    %v351 = vadd.f32 0.0, %v350
    %352 = vdwg.mxu0
    %v353 = vperm.slane %v331, 0
    %v354 = vperm.slane %v351, 0
    %v355 = vmul.f32 %v240, %v353
    %v356 = vmul.f32 %v241, %v354
    %v357 = vld [vmem:[%s4] sm:$0x3]
    %v359 = vperm.slane %v357, 0
    %v360 = vperm.slane %v357, 1
    %v363 = vmul.f32 %v355, %v359
    %v364 = vmul.f32 %v356, %v360
    %v365 = vld [vmem:[%s5] sm:$0x3]
    %v367 = vperm.slane %v365, 0
    %v368 = vperm.slane %v365, 1
    %v371 = vadd.f32 %v363, %v367
    %v372 = vadd.f32 %v364, %v368
    %v373 = vmax.f32 %v371, 0.0
    %v374 = vmax.f32 %v372, 0.0
    %v375 = vpack.c.bf16 %v373, %v373
    %v376 = vpack.c.bf16 %v374, %v374
    %v377 = vld [vmem:[%s6] sm:$0xff]
    %v378 = vld [vmem:[%s6 + $0x8] sm:$0xff]
    %v379 = vld [vmem:[%s6 + $0x10] sm:$0xff]
    %v380 = vld [vmem:[%s6 + $0x18] sm:$0xff]
    %v381 = vld [vmem:[%s6 + $0x20] sm:$0xff]
    %v382 = vld [vmem:[%s6 + $0x28] sm:$0xff]
    %v383 = vld [vmem:[%s6 + $0x30] sm:$0xff]
    %v384 = vld [vmem:[%s6 + $0x38] sm:$0xff]
    %v385 = vld [vmem:[%s6 + $0x40] sm:$0xff]
    %v386 = vld [vmem:[%s6 + $0x48] sm:$0xff]
    %v387 = vld [vmem:[%s6 + $0x50] sm:$0xff]
    %v388 = vld [vmem:[%s6 + $0x58] sm:$0xff]
    %v389 = vld [vmem:[%s6 + $0x60] sm:$0xff]
    %v390 = vld [vmem:[%s6 + $0x68] sm:$0xff]
    %v391 = vld [vmem:[%s6 + $0x70] sm:$0xff]
    %v392 = vld [vmem:[%s6 + $0x78] sm:$0xff]
    %v393 = vld [vmem:[%s6 + $0x80] sm:$0xff]
    %v394 = vld [vmem:[%s6 + $0x88] sm:$0xff]
    %v395 = vld [vmem:[%s6 + $0x90] sm:$0xff]
    %v396 = vld [vmem:[%s6 + $0x98] sm:$0xff]
    %v397 = vld [vmem:[%s6 + $0xa0] sm:$0xff]
    %v398 = vld [vmem:[%s6 + $0xa8] sm:$0xff]
    %v399 = vld [vmem:[%s6 + $0xb0] sm:$0xff]
    %v400 = vld [vmem:[%s6 + $0xb8] sm:$0xff]
    %v401 = vld [vmem:[%s6 + $0xc0] sm:$0xff]
    %v402 = vld [vmem:[%s6 + $0xc8] sm:$0xff]
    %v403 = vld [vmem:[%s6 + $0xd0] sm:$0xff]
    %v404 = vld [vmem:[%s6 + $0xd8] sm:$0xff]
    %v405 = vld [vmem:[%s6 + $0xe0] sm:$0xff]
    %v406 = vld [vmem:[%s6 + $0xe8] sm:$0xff]
    %v407 = vld [vmem:[%s6 + $0xf0] sm:$0xff]
    %v408 = vld [vmem:[%s6 + $0xf8] sm:$0xff]
    %v409 = vld [vmem:[%s6 + $0x100] sm:$0xff]
    %v410 = vld [vmem:[%s6 + $0x108] sm:$0xff]
    %v411 = vld [vmem:[%s6 + $0x110] sm:$0xff]
    %v412 = vld [vmem:[%s6 + $0x118] sm:$0xff]
    %v413 = vld [vmem:[%s6 + $0x120] sm:$0xff]
    %v414 = vld [vmem:[%s6 + $0x128] sm:$0xff]
    %v415 = vld [vmem:[%s6 + $0x130] sm:$0xff]
    %v416 = vld [vmem:[%s6 + $0x138] sm:$0xff]
    %v417 = vld [vmem:[%s6 + $0x140] sm:$0xff]
    %v418 = vld [vmem:[%s6 + $0x148] sm:$0xff]
    %v419 = vld [vmem:[%s6 + $0x150] sm:$0xff]
    %v420 = vld [vmem:[%s6 + $0x158] sm:$0xff]
    %v421 = vld [vmem:[%s6 + $0x160] sm:$0xff]
    %v422 = vld [vmem:[%s6 + $0x168] sm:$0xff]
    %v423 = vld [vmem:[%s6 + $0x170] sm:$0xff]
    %v424 = vld [vmem:[%s6 + $0x178] sm:$0xff]
    %v425 = vld [vmem:[%s6 + $0x180] sm:$0xff]
    %v426 = vld [vmem:[%s6 + $0x188] sm:$0xff]
    %v427 = vld [vmem:[%s6 + $0x190] sm:$0xff]
    %v428 = vld [vmem:[%s6 + $0x198] sm:$0xff]
    %v429 = vld [vmem:[%s6 + $0x1a0] sm:$0xff]
    %v430 = vld [vmem:[%s6 + $0x1a8] sm:$0xff]
    %v431 = vld [vmem:[%s6 + $0x1b0] sm:$0xff]
    %v432 = vld [vmem:[%s6 + $0x1b8] sm:$0xff]
    %v433 = vld [vmem:[%s6 + $0x1c0] sm:$0xff]
    %v434 = vld [vmem:[%s6 + $0x1c8] sm:$0xff]
    %v435 = vld [vmem:[%s6 + $0x1d0] sm:$0xff]
    %v436 = vld [vmem:[%s6 + $0x1d8] sm:$0xff]
    %v437 = vld [vmem:[%s6 + $0x1e0] sm:$0xff]
    %v438 = vld [vmem:[%s6 + $0x1e8] sm:$0xff]
    %v439 = vld [vmem:[%s6 + $0x1f0] sm:$0xff]
    %v440 = vld [vmem:[%s6 + $0x1f8] sm:$0xff]
    %v505 = vunpack.c.l.b16 %v377
    %v506 = vunpack.c.h.b16 %v377
    %v507 = vunpack.c.l.b16 %v378
    %v508 = vunpack.c.h.b16 %v378
    %v509 = vunpack.c.l.b16 %v379
    %v510 = vunpack.c.h.b16 %v379
    %v511 = vunpack.c.l.b16 %v380
    %v512 = vunpack.c.h.b16 %v380
    %v513 = vunpack.c.l.b16 %v381
    %v514 = vunpack.c.h.b16 %v381
    %v515 = vunpack.c.l.b16 %v382
    %v516 = vunpack.c.h.b16 %v382
    %v517 = vunpack.c.l.b16 %v383
    %v518 = vunpack.c.h.b16 %v383
    %v519 = vunpack.c.l.b16 %v384
    %v520 = vunpack.c.h.b16 %v384
    %v521 = vunpack.c.l.b16 %v385
    %v522 = vunpack.c.h.b16 %v385
    %v523 = vunpack.c.l.b16 %v386
    %v524 = vunpack.c.h.b16 %v386
    %v525 = vunpack.c.l.b16 %v387
    %v526 = vunpack.c.h.b16 %v387
    %v527 = vunpack.c.l.b16 %v388
    %v528 = vunpack.c.h.b16 %v388
    %v529 = vunpack.c.l.b16 %v389
    %v530 = vunpack.c.h.b16 %v389
    %v531 = vunpack.c.l.b16 %v390
    %v532 = vunpack.c.h.b16 %v390
    %v533 = vunpack.c.l.b16 %v391
    %v534 = vunpack.c.h.b16 %v391
    %v535 = vunpack.c.l.b16 %v392
    %v536 = vunpack.c.h.b16 %v392
    %v537 = vunpack.c.l.b16 %v393
    %v538 = vunpack.c.h.b16 %v393
    %v539 = vunpack.c.l.b16 %v394
    %v540 = vunpack.c.h.b16 %v394
    %v541 = vunpack.c.l.b16 %v395
    %v542 = vunpack.c.h.b16 %v395
    %v543 = vunpack.c.l.b16 %v396
    %v544 = vunpack.c.h.b16 %v396
    %v545 = vunpack.c.l.b16 %v397
    %v546 = vunpack.c.h.b16 %v397
    %v547 = vunpack.c.l.b16 %v398
    %v548 = vunpack.c.h.b16 %v398
    %v549 = vunpack.c.l.b16 %v399
    %v550 = vunpack.c.h.b16 %v399
    %v551 = vunpack.c.l.b16 %v400
    %v552 = vunpack.c.h.b16 %v400
    %v553 = vunpack.c.l.b16 %v401
    %v554 = vunpack.c.h.b16 %v401
    %v555 = vunpack.c.l.b16 %v402
    %v556 = vunpack.c.h.b16 %v402
    %v557 = vunpack.c.l.b16 %v403
    %v558 = vunpack.c.h.b16 %v403
    %v559 = vunpack.c.l.b16 %v404
    %v560 = vunpack.c.h.b16 %v404
    %v561 = vunpack.c.l.b16 %v405
    %v562 = vunpack.c.h.b16 %v405
    %v563 = vunpack.c.l.b16 %v406
    %v564 = vunpack.c.h.b16 %v406
    %v565 = vunpack.c.l.b16 %v407
    %v566 = vunpack.c.h.b16 %v407
    %v567 = vunpack.c.l.b16 %v408
    %v568 = vunpack.c.h.b16 %v408
    %v569 = vunpack.c.l.b16 %v409
    %v570 = vunpack.c.h.b16 %v409
    %v571 = vunpack.c.l.b16 %v410
    %v572 = vunpack.c.h.b16 %v410
    %v573 = vunpack.c.l.b16 %v411
    %v574 = vunpack.c.h.b16 %v411
    %v575 = vunpack.c.l.b16 %v412
    %v576 = vunpack.c.h.b16 %v412
    %v577 = vunpack.c.l.b16 %v413
    %v578 = vunpack.c.h.b16 %v413
    %v579 = vunpack.c.l.b16 %v414
    %v580 = vunpack.c.h.b16 %v414
    %v581 = vunpack.c.l.b16 %v415
    %v582 = vunpack.c.h.b16 %v415
    %v583 = vunpack.c.l.b16 %v416
    %v584 = vunpack.c.h.b16 %v416
    %v585 = vunpack.c.l.b16 %v417
    %v586 = vunpack.c.h.b16 %v417
    %v587 = vunpack.c.l.b16 %v418
    %v588 = vunpack.c.h.b16 %v418
    %v589 = vunpack.c.l.b16 %v419
    %v590 = vunpack.c.h.b16 %v419
    %v591 = vunpack.c.l.b16 %v420
    %v592 = vunpack.c.h.b16 %v420
    %v593 = vunpack.c.l.b16 %v421
    %v594 = vunpack.c.h.b16 %v421
    %v595 = vunpack.c.l.b16 %v422
    %v596 = vunpack.c.h.b16 %v422
    %v597 = vunpack.c.l.b16 %v423
    %v598 = vunpack.c.h.b16 %v423
    %v599 = vunpack.c.l.b16 %v424
    %v600 = vunpack.c.h.b16 %v424
    %v601 = vunpack.c.l.b16 %v425
    %v602 = vunpack.c.h.b16 %v425
    %v603 = vunpack.c.l.b16 %v426
    %v604 = vunpack.c.h.b16 %v426
    %v605 = vunpack.c.l.b16 %v427
    %v606 = vunpack.c.h.b16 %v427
    %v607 = vunpack.c.l.b16 %v428
    %v608 = vunpack.c.h.b16 %v428
    %v609 = vunpack.c.l.b16 %v429
    %v610 = vunpack.c.h.b16 %v429
    %v611 = vunpack.c.l.b16 %v430
    %v612 = vunpack.c.h.b16 %v430
    %v613 = vunpack.c.l.b16 %v431
    %v614 = vunpack.c.h.b16 %v431
    %v615 = vunpack.c.l.b16 %v432
    %v616 = vunpack.c.h.b16 %v432
    %v617 = vunpack.c.l.b16 %v433
    %v618 = vunpack.c.h.b16 %v433
    %v619 = vunpack.c.l.b16 %v434
    %v620 = vunpack.c.h.b16 %v434
    %v621 = vunpack.c.l.b16 %v435
    %v622 = vunpack.c.h.b16 %v435
    %v623 = vunpack.c.l.b16 %v436
    %v624 = vunpack.c.h.b16 %v436
    %v625 = vunpack.c.l.b16 %v437
    %v626 = vunpack.c.h.b16 %v437
    %v627 = vunpack.c.l.b16 %v438
    %v628 = vunpack.c.h.b16 %v438
    %v629 = vunpack.c.l.b16 %v439
    %v630 = vunpack.c.h.b16 %v439
    %v631 = vunpack.c.l.b16 %v440
    %v632 = vunpack.c.h.b16 %v440
    %v633 = vpack.c.b16 %v509, %v505
    %v634 = vpack.c.b16 %v510, %v506
    %v635 = vpack.c.b16 %v511, %v507
    %v636 = vpack.c.b16 %v512, %v508
    %v637 = vpack.c.b16 %v517, %v513
    %v638 = vpack.c.b16 %v518, %v514
    %v639 = vpack.c.b16 %v519, %v515
    %v640 = vpack.c.b16 %v520, %v516
    %v641 = vpack.c.b16 %v525, %v521
    %v642 = vpack.c.b16 %v526, %v522
    %v643 = vpack.c.b16 %v527, %v523
    %v644 = vpack.c.b16 %v528, %v524
    %v645 = vpack.c.b16 %v533, %v529
    %v646 = vpack.c.b16 %v534, %v530
    %v647 = vpack.c.b16 %v535, %v531
    %v648 = vpack.c.b16 %v536, %v532
    %v649 = vpack.c.b16 %v541, %v537
    %v650 = vpack.c.b16 %v542, %v538
    %v651 = vpack.c.b16 %v543, %v539
    %v652 = vpack.c.b16 %v544, %v540
    %v653 = vpack.c.b16 %v549, %v545
    %v654 = vpack.c.b16 %v550, %v546
    %v655 = vpack.c.b16 %v551, %v547
    %v656 = vpack.c.b16 %v552, %v548
    %v657 = vpack.c.b16 %v557, %v553
    %v658 = vpack.c.b16 %v558, %v554
    %v659 = vpack.c.b16 %v559, %v555
    %v660 = vpack.c.b16 %v560, %v556
    %v661 = vpack.c.b16 %v565, %v561
    %v662 = vpack.c.b16 %v566, %v562
    %v663 = vpack.c.b16 %v567, %v563
    %v664 = vpack.c.b16 %v568, %v564
    %v665 = vpack.c.b16 %v573, %v569
    %v666 = vpack.c.b16 %v574, %v570
    %v667 = vpack.c.b16 %v575, %v571
    %v668 = vpack.c.b16 %v576, %v572
    %v669 = vpack.c.b16 %v581, %v577
    %v670 = vpack.c.b16 %v582, %v578
    %v671 = vpack.c.b16 %v583, %v579
    %v672 = vpack.c.b16 %v584, %v580
    %v673 = vpack.c.b16 %v589, %v585
    %v674 = vpack.c.b16 %v590, %v586
    %v675 = vpack.c.b16 %v591, %v587
    %v676 = vpack.c.b16 %v592, %v588
    %v677 = vpack.c.b16 %v597, %v593
    %v678 = vpack.c.b16 %v598, %v594
    %v679 = vpack.c.b16 %v599, %v595
    %v680 = vpack.c.b16 %v600, %v596
    %v681 = vpack.c.b16 %v605, %v601
    %v682 = vpack.c.b16 %v606, %v602
    %v683 = vpack.c.b16 %v607, %v603
    %v684 = vpack.c.b16 %v608, %v604
    %v685 = vpack.c.b16 %v613, %v609
    %v686 = vpack.c.b16 %v614, %v610
    %v687 = vpack.c.b16 %v615, %v611
    %v688 = vpack.c.b16 %v616, %v612
    %v689 = vpack.c.b16 %v621, %v617
    %v690 = vpack.c.b16 %v622, %v618
    %v691 = vpack.c.b16 %v623, %v619
    %v692 = vpack.c.b16 %v624, %v620
    %v693 = vpack.c.b16 %v629, %v625
    %v694 = vpack.c.b16 %v630, %v626
    %v695 = vpack.c.b16 %v631, %v627
    %v696 = vpack.c.b16 %v632, %v628
    %761 = vmatpush.bf16.msra.mxu0 %v661
    %762 = vmatpush.bf16.msra.mxu0 %v657
    %763 = vmatpush.bf16.msra.mxu0 %v653
    %764 = vmatpush.bf16.msra.mxu0 %v649
    %765 = vmatpush.bf16.msra.mxu0 %v645
    %766 = vmatpush.bf16.msra.mxu0 %v641
    %767 = vmatpush.bf16.msra.mxu0 %v637
    %768 = vmatpush.bf16.msra.mxu0 %v633
    %769 = vmatmul.bf16.gmra.mxu0 %v375
    %v770 = vpop.f32.mrf.mxu0
    %v771 = vadd.f32 0.0, %v770
    %v772 = vpop.f32.mrf.mxu0
    %773 = vdwg.mxu0
    %774 = vmatpush.bf16.msra.mxu0 %v693
    %775 = vmatpush.bf16.msra.mxu0 %v689
    %776 = vmatpush.bf16.msra.mxu0 %v685
    %777 = vmatpush.bf16.msra.mxu0 %v681
    %778 = vmatpush.bf16.msra.mxu0 %v677
    %779 = vmatpush.bf16.msra.mxu0 %v673
    %780 = vmatpush.bf16.msra.mxu0 %v669
    %781 = vmatpush.bf16.msra.mxu0 %v665
    %782 = vmatmul.bf16.gmra.mxu0 %v376
    %v783 = vpop.f32.mrf.mxu0
    %v784 = vadd.f32 %v771, %v783
    %v785 = vpop.f32.mrf.mxu0
    %786 = vdwg.mxu0
    %787 = vmatpush.bf16.msra.mxu0 %v662
    %788 = vmatpush.bf16.msra.mxu0 %v658
    %789 = vmatpush.bf16.msra.mxu0 %v654
    %790 = vmatpush.bf16.msra.mxu0 %v650
    %791 = vmatpush.bf16.msra.mxu0 %v646
    %792 = vmatpush.bf16.msra.mxu0 %v642
    %793 = vmatpush.bf16.msra.mxu0 %v638
    %794 = vmatpush.bf16.msra.mxu0 %v634
    %795 = vmatmul.bf16.gmra.mxu0 %v375
    %v796 = vpop.f32.mrf.mxu0
    %v797 = vadd.f32 0.0, %v796
    %v798 = vpop.f32.mrf.mxu0
    %799 = vdwg.mxu0
    %800 = vmatpush.bf16.msra.mxu0 %v694
    %801 = vmatpush.bf16.msra.mxu0 %v690
    %802 = vmatpush.bf16.msra.mxu0 %v686
    %803 = vmatpush.bf16.msra.mxu0 %v682
    %804 = vmatpush.bf16.msra.mxu0 %v678
    %805 = vmatpush.bf16.msra.mxu0 %v674
    %806 = vmatpush.bf16.msra.mxu0 %v670
    %807 = vmatpush.bf16.msra.mxu0 %v666
    %808 = vmatmul.bf16.gmra.mxu0 %v376
    %v809 = vpop.f32.mrf.mxu0
    %v810 = vadd.f32 %v797, %v809
    %v811 = vpop.f32.mrf.mxu0
    %812 = vdwg.mxu0
    %813 = vmatpush.bf16.msra.mxu0 %v663
    %814 = vmatpush.bf16.msra.mxu0 %v659
    %815 = vmatpush.bf16.msra.mxu0 %v655
    %816 = vmatpush.bf16.msra.mxu0 %v651
    %817 = vmatpush.bf16.msra.mxu0 %v647
    %818 = vmatpush.bf16.msra.mxu0 %v643
    %819 = vmatpush.bf16.msra.mxu0 %v639
    %820 = vmatpush.bf16.msra.mxu0 %v635
    %821 = vmatmul.bf16.gmra.mxu0 %v375
    %v822 = vpop.f32.mrf.mxu0
    %v823 = vadd.f32 0.0, %v822
    %v824 = vpop.f32.mrf.mxu0
    %825 = vdwg.mxu0
    %826 = vmatpush.bf16.msra.mxu0 %v695
    %827 = vmatpush.bf16.msra.mxu0 %v691
    %828 = vmatpush.bf16.msra.mxu0 %v687
    %829 = vmatpush.bf16.msra.mxu0 %v683
    %830 = vmatpush.bf16.msra.mxu0 %v679
    %831 = vmatpush.bf16.msra.mxu0 %v675
    %832 = vmatpush.bf16.msra.mxu0 %v671
    %833 = vmatpush.bf16.msra.mxu0 %v667
    %834 = vmatmul.bf16.gmra.mxu0 %v376
    %v835 = vpop.f32.mrf.mxu0
    %v836 = vadd.f32 %v823, %v835
    %v837 = vpop.f32.mrf.mxu0
    %838 = vdwg.mxu0
    %839 = vmatpush.bf16.msra.mxu0 %v664
    %840 = vmatpush.bf16.msra.mxu0 %v660
    %841 = vmatpush.bf16.msra.mxu0 %v656
    %842 = vmatpush.bf16.msra.mxu0 %v652
    %843 = vmatpush.bf16.msra.mxu0 %v648
    %844 = vmatpush.bf16.msra.mxu0 %v644
    %845 = vmatpush.bf16.msra.mxu0 %v640
    %846 = vmatpush.bf16.msra.mxu0 %v636
    %847 = vmatmul.bf16.gmra.mxu0 %v375
    %v848 = vpop.f32.mrf.mxu0
    %v849 = vadd.f32 0.0, %v848
    %v850 = vpop.f32.mrf.mxu0
    %851 = vdwg.mxu0
    %852 = vmatpush.bf16.msra.mxu0 %v696
    %853 = vmatpush.bf16.msra.mxu0 %v692
    %854 = vmatpush.bf16.msra.mxu0 %v688
    %855 = vmatpush.bf16.msra.mxu0 %v684
    %856 = vmatpush.bf16.msra.mxu0 %v680
    %857 = vmatpush.bf16.msra.mxu0 %v676
    %858 = vmatpush.bf16.msra.mxu0 %v672
    %859 = vmatpush.bf16.msra.mxu0 %v668
    %860 = vmatmul.bf16.gmra.mxu0 %v376
    %v861 = vpop.f32.mrf.mxu0
    %v862 = vadd.f32 %v849, %v861
    %v863 = vpop.f32.mrf.mxu0
    %864 = vdwg.mxu0
    %v865 = vsel %vm103, %v784, 0.0
    %v866 = vrot.slane %v865, 4
    %v867 = vadd.f32 %v865, %v866
    %v868 = vrot.slane %v867, 2
    %v869 = vadd.f32 %v867, %v868
    %v870 = vrot.slane %v869, 1
    %v871 = vadd.f32 %v869, %v870
    %v872 = vsel %vm103, %v810, 0.0
    %v873 = vrot.slane %v872, 4
    %v874 = vadd.f32 %v872, %v873
    %v875 = vrot.slane %v874, 2
    %v876 = vadd.f32 %v874, %v875
    %v877 = vrot.slane %v876, 1
    %v878 = vadd.f32 %v876, %v877
    %v879 = vsel %vm103, %v836, 0.0
    %v880 = vrot.slane %v879, 4
    %v881 = vadd.f32 %v879, %v880
    %v882 = vrot.slane %v881, 2
    %v883 = vadd.f32 %v881, %v882
    %v884 = vrot.slane %v883, 1
    %v885 = vadd.f32 %v883, %v884
    %v886 = vsel %vm103, %v862, 0.0
    %v887 = vrot.slane %v886, 4
    %v888 = vadd.f32 %v886, %v887
    %v889 = vrot.slane %v888, 2
    %v890 = vadd.f32 %v888, %v889
    %v891 = vrot.slane %v890, 1
    %v892 = vadd.f32 %v890, %v891
    %v893 = vld [vmem:[%s7] sm:$0xff]
    %v894 = vld [vmem:[%s7 + $0x8] sm:$0xff]
    %v895 = vld [vmem:[%s7 + $0x10] sm:$0xff]
    %v896 = vld [vmem:[%s7 + $0x18] sm:$0xff]
    %v897 = vld [vmem:[%s7 + $0x20] sm:$0xff]
    %v898 = vld [vmem:[%s7 + $0x28] sm:$0xff]
    %v899 = vld [vmem:[%s7 + $0x30] sm:$0xff]
    %v900 = vld [vmem:[%s7 + $0x38] sm:$0xff]
    %v901 = vld [vmem:[%s7 + $0x40] sm:$0xff]
    %v902 = vld [vmem:[%s7 + $0x48] sm:$0xff]
    %v903 = vld [vmem:[%s7 + $0x50] sm:$0xff]
    %v904 = vld [vmem:[%s7 + $0x58] sm:$0xff]
    %v905 = vld [vmem:[%s7 + $0x60] sm:$0xff]
    %v906 = vld [vmem:[%s7 + $0x68] sm:$0xff]
    %v907 = vld [vmem:[%s7 + $0x70] sm:$0xff]
    %v908 = vld [vmem:[%s7 + $0x78] sm:$0xff]
    %v909 = vld [vmem:[%s7 + $0x80] sm:$0xff]
    %v910 = vld [vmem:[%s7 + $0x88] sm:$0xff]
    %v911 = vld [vmem:[%s7 + $0x90] sm:$0xff]
    %v912 = vld [vmem:[%s7 + $0x98] sm:$0xff]
    %v913 = vld [vmem:[%s7 + $0xa0] sm:$0xff]
    %v914 = vld [vmem:[%s7 + $0xa8] sm:$0xff]
    %v915 = vld [vmem:[%s7 + $0xb0] sm:$0xff]
    %v916 = vld [vmem:[%s7 + $0xb8] sm:$0xff]
    %v917 = vld [vmem:[%s7 + $0xc0] sm:$0xff]
    %v918 = vld [vmem:[%s7 + $0xc8] sm:$0xff]
    %v919 = vld [vmem:[%s7 + $0xd0] sm:$0xff]
    %v920 = vld [vmem:[%s7 + $0xd8] sm:$0xff]
    %v921 = vld [vmem:[%s7 + $0xe0] sm:$0xff]
    %v922 = vld [vmem:[%s7 + $0xe8] sm:$0xff]
    %v923 = vld [vmem:[%s7 + $0xf0] sm:$0xff]
    %v924 = vld [vmem:[%s7 + $0xf8] sm:$0xff]
    %v925 = vld [vmem:[%s7 + $0x100] sm:$0xff]
    %v926 = vld [vmem:[%s7 + $0x108] sm:$0xff]
    %v927 = vld [vmem:[%s7 + $0x110] sm:$0xff]
    %v928 = vld [vmem:[%s7 + $0x118] sm:$0xff]
    %v929 = vld [vmem:[%s7 + $0x120] sm:$0xff]
    %v930 = vld [vmem:[%s7 + $0x128] sm:$0xff]
    %v931 = vld [vmem:[%s7 + $0x130] sm:$0xff]
    %v932 = vld [vmem:[%s7 + $0x138] sm:$0xff]
    %v933 = vld [vmem:[%s7 + $0x140] sm:$0xff]
    %v934 = vld [vmem:[%s7 + $0x148] sm:$0xff]
    %v935 = vld [vmem:[%s7 + $0x150] sm:$0xff]
    %v936 = vld [vmem:[%s7 + $0x158] sm:$0xff]
    %v937 = vld [vmem:[%s7 + $0x160] sm:$0xff]
    %v938 = vld [vmem:[%s7 + $0x168] sm:$0xff]
    %v939 = vld [vmem:[%s7 + $0x170] sm:$0xff]
    %v940 = vld [vmem:[%s7 + $0x178] sm:$0xff]
    %v941 = vld [vmem:[%s7 + $0x180] sm:$0xff]
    %v942 = vld [vmem:[%s7 + $0x188] sm:$0xff]
    %v943 = vld [vmem:[%s7 + $0x190] sm:$0xff]
    %v944 = vld [vmem:[%s7 + $0x198] sm:$0xff]
    %v945 = vld [vmem:[%s7 + $0x1a0] sm:$0xff]
    %v946 = vld [vmem:[%s7 + $0x1a8] sm:$0xff]
    %v947 = vld [vmem:[%s7 + $0x1b0] sm:$0xff]
    %v948 = vld [vmem:[%s7 + $0x1b8] sm:$0xff]
    %v949 = vld [vmem:[%s7 + $0x1c0] sm:$0xff]
    %v950 = vld [vmem:[%s7 + $0x1c8] sm:$0xff]
    %v951 = vld [vmem:[%s7 + $0x1d0] sm:$0xff]
    %v952 = vld [vmem:[%s7 + $0x1d8] sm:$0xff]
    %v953 = vld [vmem:[%s7 + $0x1e0] sm:$0xff]
    %v954 = vld [vmem:[%s7 + $0x1e8] sm:$0xff]
    %v955 = vld [vmem:[%s7 + $0x1f0] sm:$0xff]
    %v956 = vld [vmem:[%s7 + $0x1f8] sm:$0xff]
    %957 = vmatpush.msra.mxu0 %v908
    %958 = vmatpush.msra.mxu0 %v907
    %959 = vmatpush.msra.mxu0 %v906
    %960 = vmatpush.msra.mxu0 %v905
    %961 = vmatpush.msra.mxu0 %v904
    %962 = vmatpush.msra.mxu0 %v903
    %963 = vmatpush.msra.mxu0 %v902
    %964 = vmatpush.msra.mxu0 %v901
    %965 = vmatpush.msra.mxu0 %v900
    %966 = vmatpush.msra.mxu0 %v899
    %967 = vmatpush.msra.mxu0 %v898
    %968 = vmatpush.msra.mxu0 %v897
    %969 = vmatpush.msra.mxu0 %v896
    %970 = vmatpush.msra.mxu0 %v895
    %971 = vmatpush.msra.mxu0 %v894
    %972 = vmatpush.msra.mxu0 %v893
    %973 = vmatmul.f32.gmra.mxu0 %v871
    %v974 = vpop.f32.mrf.mxu0
    %v975 = vadd.f32 0.0, %v974
    %976 = vdwg.mxu0
    %977 = vmatpush.msra.mxu0 %v924
    %978 = vmatpush.msra.mxu0 %v923
    %979 = vmatpush.msra.mxu0 %v922
    %980 = vmatpush.msra.mxu0 %v921
    %981 = vmatpush.msra.mxu0 %v920
    %982 = vmatpush.msra.mxu0 %v919
    %983 = vmatpush.msra.mxu0 %v918
    %984 = vmatpush.msra.mxu0 %v917
    %985 = vmatpush.msra.mxu0 %v916
    %986 = vmatpush.msra.mxu0 %v915
    %987 = vmatpush.msra.mxu0 %v914
    %988 = vmatpush.msra.mxu0 %v913
    %989 = vmatpush.msra.mxu0 %v912
    %990 = vmatpush.msra.mxu0 %v911
    %991 = vmatpush.msra.mxu0 %v910
    %992 = vmatpush.msra.mxu0 %v909
    %993 = vmatmul.f32.gmra.mxu0 %v878
    %v994 = vpop.f32.mrf.mxu0
    %v995 = vadd.f32 %v975, %v994
    %996 = vdwg.mxu0
    %997 = vmatpush.msra.mxu0 %v940
    %998 = vmatpush.msra.mxu0 %v939
    %999 = vmatpush.msra.mxu0 %v938
    %1000 = vmatpush.msra.mxu0 %v937
    %1001 = vmatpush.msra.mxu0 %v936
    %1002 = vmatpush.msra.mxu0 %v935
    %1003 = vmatpush.msra.mxu0 %v934
    %1004 = vmatpush.msra.mxu0 %v933
    %1005 = vmatpush.msra.mxu0 %v932
    %1006 = vmatpush.msra.mxu0 %v931
    %1007 = vmatpush.msra.mxu0 %v930
    %1008 = vmatpush.msra.mxu0 %v929
    %1009 = vmatpush.msra.mxu0 %v928
    %1010 = vmatpush.msra.mxu0 %v927
    %1011 = vmatpush.msra.mxu0 %v926
    %1012 = vmatpush.msra.mxu0 %v925
    %1013 = vmatmul.f32.gmra.mxu0 %v885
    %v1014 = vpop.f32.mrf.mxu0
    %v1015 = vadd.f32 %v995, %v1014
    %1016 = vdwg.mxu0
    %1017 = vmatpush.msra.mxu0 %v956
    %1018 = vmatpush.msra.mxu0 %v955
    %1019 = vmatpush.msra.mxu0 %v954
    %1020 = vmatpush.msra.mxu0 %v953
    %1021 = vmatpush.msra.mxu0 %v952
    %1022 = vmatpush.msra.mxu0 %v951
    %1023 = vmatpush.msra.mxu0 %v950
    %1024 = vmatpush.msra.mxu0 %v949
    %1025 = vmatpush.msra.mxu0 %v948
    %1026 = vmatpush.msra.mxu0 %v947
    %1027 = vmatpush.msra.mxu0 %v946
    %1028 = vmatpush.msra.mxu0 %v945
    %1029 = vmatpush.msra.mxu0 %v944
    %1030 = vmatpush.msra.mxu0 %v943
    %1031 = vmatpush.msra.mxu0 %v942
    %1032 = vmatpush.msra.mxu0 %v941
    %1033 = vmatmul.f32.gmra.mxu0 %v892
    %v1034 = vpop.f32.mrf.mxu0
    %v1035 = vadd.f32 %v1015, %v1034
    %1036 = vdwg.mxu0
    %v1037 = vmul.f32 %v1035, 0.0078125
    %v1038 = vld [vmem:[%s8] sm:$0xff]
    %v1039 = vld [vmem:[%s8 + $0x8] sm:$0xff]
    %v1040 = vld [vmem:[%s8 + $0x10] sm:$0xff]
    %v1041 = vld [vmem:[%s8 + $0x18] sm:$0xff]
    %vm1042 = vcmask 64512
    %v1044 = vsel %vm1042, %v1037, 0
    %1046 = vmatpush.msra.mxu0 0.0
    %1047 = vmatpush.msra.mxu0 0.0
    %1048 = vmatpush.msra.mxu0 0.0
    %1049 = vmatpush.msra.mxu0 0.0
    %1050 = vmatpush.msra.mxu0 0.0
    %1051 = vmatpush.msra.mxu0 0.0
    %1052 = vmatpush.msra.mxu0 0.0
    %1053 = vmatpush.msra.mxu0 0.0
    %1054 = vmatpush.msra.mxu0 0.0
    %1055 = vmatpush.msra.mxu0 0.0
    %1056 = vmatpush.msra.mxu0 0.0
    %1057 = vmatpush.msra.mxu0 0.0
    %1058 = vmatpush.msra.mxu0 0.0
    %1059 = vmatpush.msra.mxu0 0.0
    %1060 = vmatpush.msra.mxu0 0.0
    %1061 = vmatpush.msra.mxu0 %v1038
    %1062 = vmatmul.f32.gmra.mxu0 %v1044
    %v1063 = vpop.f32.mrf.mxu0
    %v1064 = vadd.f32 0.0, %v1063
    %1065 = vdwg.mxu0
    %1066 = vmatpush.msra.mxu0 0.0
    %1067 = vmatpush.msra.mxu0 0.0
    %1068 = vmatpush.msra.mxu0 0.0
    %1069 = vmatpush.msra.mxu0 0.0
    %1070 = vmatpush.msra.mxu0 0.0
    %1071 = vmatpush.msra.mxu0 0.0
    %1072 = vmatpush.msra.mxu0 0.0
    %1073 = vmatpush.msra.mxu0 0.0
    %1074 = vmatpush.msra.mxu0 0.0
    %1075 = vmatpush.msra.mxu0 0.0
    %1076 = vmatpush.msra.mxu0 0.0
    %1077 = vmatpush.msra.mxu0 0.0
    %1078 = vmatpush.msra.mxu0 0.0
    %1079 = vmatpush.msra.mxu0 0.0
    %1080 = vmatpush.msra.mxu0 0.0
    %1081 = vmatpush.msra.mxu0 %v1039
    %1082 = vmatmul.f32.gmra.mxu0 %v1044
    %v1083 = vpop.f32.mrf.mxu0
    %v1084 = vadd.f32 0.0, %v1083
    %1085 = vdwg.mxu0
    %1086 = vmatpush.msra.mxu0 0.0
    %1087 = vmatpush.msra.mxu0 0.0
    %1088 = vmatpush.msra.mxu0 0.0
    %1089 = vmatpush.msra.mxu0 0.0
    %1090 = vmatpush.msra.mxu0 0.0
    %1091 = vmatpush.msra.mxu0 0.0
    %1092 = vmatpush.msra.mxu0 0.0
    %1093 = vmatpush.msra.mxu0 0.0
    %1094 = vmatpush.msra.mxu0 0.0
    %1095 = vmatpush.msra.mxu0 0.0
    %1096 = vmatpush.msra.mxu0 0.0
    %1097 = vmatpush.msra.mxu0 0.0
    %1098 = vmatpush.msra.mxu0 0.0
    %1099 = vmatpush.msra.mxu0 0.0
    %1100 = vmatpush.msra.mxu0 0.0
    %1101 = vmatpush.msra.mxu0 %v1040
    %1102 = vmatmul.f32.gmra.mxu0 %v1044
    %v1103 = vpop.f32.mrf.mxu0
    %v1104 = vadd.f32 0.0, %v1103
    %1105 = vdwg.mxu0
    %1106 = vmatpush.msra.mxu0 0.0
    %1107 = vmatpush.msra.mxu0 0.0
    %1108 = vmatpush.msra.mxu0 0.0
    %1109 = vmatpush.msra.mxu0 0.0
    %1110 = vmatpush.msra.mxu0 0.0
    %1111 = vmatpush.msra.mxu0 0.0
    %1112 = vmatpush.msra.mxu0 0.0
    %1113 = vmatpush.msra.mxu0 0.0
    %1114 = vmatpush.msra.mxu0 0.0
    %1115 = vmatpush.msra.mxu0 0.0
    %1116 = vmatpush.msra.mxu0 0.0
    %1117 = vmatpush.msra.mxu0 0.0
    %1118 = vmatpush.msra.mxu0 0.0
    %1119 = vmatpush.msra.mxu0 0.0
    %1120 = vmatpush.msra.mxu0 0.0
    %1121 = vmatpush.msra.mxu0 %v1041
    %1122 = vmatmul.f32.gmra.mxu0 %v1044
    %v1123 = vpop.f32.mrf.mxu0
    %v1124 = vadd.f32 0.0, %v1123
    %1125 = vdwg.mxu0
    %v1126 = vperm.slane %v1064, 0
    %v1127 = vperm.slane %v1084, 0
    %v1128 = vperm.slane %v1104, 0
    %v1129 = vperm.slane %v1124, 0
    %v1130 = vsub.f32 %v784, %v1126
    %v1131 = vsub.f32 %v810, %v1127
    %v1132 = vsub.f32 %v836, %v1128
    %v1133 = vsub.f32 %v862, %v1129
    %v1134 = vmul.f32 %v1130, %v1130
    %v1135 = vmul.f32 %v1131, %v1131
    %v1136 = vmul.f32 %v1132, %v1132
    %v1137 = vmul.f32 %v1133, %v1133
    %v1138 = vsel %vm103, %v1134, 0.0
    %v1139 = vrot.slane %v1138, 4
    %v1140 = vadd.f32 %v1138, %v1139
    %v1141 = vrot.slane %v1140, 2
    %v1142 = vadd.f32 %v1140, %v1141
    %v1143 = vrot.slane %v1142, 1
    %v1144 = vadd.f32 %v1142, %v1143
    %v1145 = vsel %vm103, %v1135, 0.0
    %v1146 = vrot.slane %v1145, 4
    %v1147 = vadd.f32 %v1145, %v1146
    %v1148 = vrot.slane %v1147, 2
    %v1149 = vadd.f32 %v1147, %v1148
    %v1150 = vrot.slane %v1149, 1
    %v1151 = vadd.f32 %v1149, %v1150
    %v1152 = vsel %vm103, %v1136, 0.0
    %v1153 = vrot.slane %v1152, 4
    %v1154 = vadd.f32 %v1152, %v1153
    %v1155 = vrot.slane %v1154, 2
    %v1156 = vadd.f32 %v1154, %v1155
    %v1157 = vrot.slane %v1156, 1
    %v1158 = vadd.f32 %v1156, %v1157
    %v1159 = vsel %vm103, %v1137, 0.0
    %v1160 = vrot.slane %v1159, 4
    %v1161 = vadd.f32 %v1159, %v1160
    %v1162 = vrot.slane %v1161, 2
    %v1163 = vadd.f32 %v1161, %v1162
    %v1164 = vrot.slane %v1163, 1
    %v1165 = vadd.f32 %v1163, %v1164
    %1166 = vmatpush.msra.mxu0 %v908
    %1167 = vmatpush.msra.mxu0 %v907
    %1168 = vmatpush.msra.mxu0 %v906
    %1169 = vmatpush.msra.mxu0 %v905
    %1170 = vmatpush.msra.mxu0 %v904
    %1171 = vmatpush.msra.mxu0 %v903
    %1172 = vmatpush.msra.mxu0 %v902
    %1173 = vmatpush.msra.mxu0 %v901
    %1174 = vmatpush.msra.mxu0 %v900
    %1175 = vmatpush.msra.mxu0 %v899
    %1176 = vmatpush.msra.mxu0 %v898
    %1177 = vmatpush.msra.mxu0 %v897
    %1178 = vmatpush.msra.mxu0 %v896
    %1179 = vmatpush.msra.mxu0 %v895
    %1180 = vmatpush.msra.mxu0 %v894
    %1181 = vmatpush.msra.mxu0 %v893
    %1182 = vmatmul.f32.gmra.mxu0 %v1144
    %v1183 = vpop.f32.mrf.mxu0
    %v1184 = vadd.f32 0.0, %v1183
    %1185 = vdwg.mxu0
    %1186 = vmatpush.msra.mxu0 %v924
    %1187 = vmatpush.msra.mxu0 %v923
    %1188 = vmatpush.msra.mxu0 %v922
    %1189 = vmatpush.msra.mxu0 %v921
    %1190 = vmatpush.msra.mxu0 %v920
    %1191 = vmatpush.msra.mxu0 %v919
    %1192 = vmatpush.msra.mxu0 %v918
    %1193 = vmatpush.msra.mxu0 %v917
    %1194 = vmatpush.msra.mxu0 %v916
    %1195 = vmatpush.msra.mxu0 %v915
    %1196 = vmatpush.msra.mxu0 %v914
    %1197 = vmatpush.msra.mxu0 %v913
    %1198 = vmatpush.msra.mxu0 %v912
    %1199 = vmatpush.msra.mxu0 %v911
    %1200 = vmatpush.msra.mxu0 %v910
    %1201 = vmatpush.msra.mxu0 %v909
    %1202 = vmatmul.f32.gmra.mxu0 %v1151
    %v1203 = vpop.f32.mrf.mxu0
    %v1204 = vadd.f32 %v1184, %v1203
    %1205 = vdwg.mxu0
    %1206 = vmatpush.msra.mxu0 %v940
    %1207 = vmatpush.msra.mxu0 %v939
    %1208 = vmatpush.msra.mxu0 %v938
    %1209 = vmatpush.msra.mxu0 %v937
    %1210 = vmatpush.msra.mxu0 %v936
    %1211 = vmatpush.msra.mxu0 %v935
    %1212 = vmatpush.msra.mxu0 %v934
    %1213 = vmatpush.msra.mxu0 %v933
    %1214 = vmatpush.msra.mxu0 %v932
    %1215 = vmatpush.msra.mxu0 %v931
    %1216 = vmatpush.msra.mxu0 %v930
    %1217 = vmatpush.msra.mxu0 %v929
    %1218 = vmatpush.msra.mxu0 %v928
    %1219 = vmatpush.msra.mxu0 %v927
    %1220 = vmatpush.msra.mxu0 %v926
    %1221 = vmatpush.msra.mxu0 %v925
    %1222 = vmatmul.f32.gmra.mxu0 %v1158
    %v1223 = vpop.f32.mrf.mxu0
    %v1224 = vadd.f32 %v1204, %v1223
    %1225 = vdwg.mxu0
    %1226 = vmatpush.msra.mxu0 %v956
    %1227 = vmatpush.msra.mxu0 %v955
    %1228 = vmatpush.msra.mxu0 %v954
    %1229 = vmatpush.msra.mxu0 %v953
    %1230 = vmatpush.msra.mxu0 %v952
    %1231 = vmatpush.msra.mxu0 %v951
    %1232 = vmatpush.msra.mxu0 %v950
    %1233 = vmatpush.msra.mxu0 %v949
    %1234 = vmatpush.msra.mxu0 %v948
    %1235 = vmatpush.msra.mxu0 %v947
    %1236 = vmatpush.msra.mxu0 %v946
    %1237 = vmatpush.msra.mxu0 %v945
    %1238 = vmatpush.msra.mxu0 %v944
    %1239 = vmatpush.msra.mxu0 %v943
    %1240 = vmatpush.msra.mxu0 %v942
    %1241 = vmatpush.msra.mxu0 %v941
    %1242 = vmatmul.f32.gmra.mxu0 %v1165
    %v1243 = vpop.f32.mrf.mxu0
    %v1244 = vadd.f32 %v1224, %v1243
    %1245 = vdwg.mxu0
    %v1246 = vmul.f32 %v1244, 0.0078125
    %v1247 = vadd.f32 %v1246, 1e-05
    %v1248 = vrsqrt.pop %v1247
    %v1249 = vmul.f32 %v1248, %v1247
    %v1250 = vmul.f32 %v1249, %v1248
    %v1251 = vmul.f32 0.5, %v1250
    %v1252 = vsub.f32 1.5, %v1251
    %v1253 = vmul.f32 %v1248, %v1252
    %vm1254 = vweird.f32 %v1247
    %vm1255 = vweird.f32 %v1248
    %vm1256 = vmor %vm1254, %vm1255
    %v1257 = vsel %vm1256, %v1248, %v1253
    %v1259 = vsel %vm1042, %v1257, 0
    %1261 = vmatpush.msra.mxu0 0.0
    %1262 = vmatpush.msra.mxu0 0.0
    %1263 = vmatpush.msra.mxu0 0.0
    %1264 = vmatpush.msra.mxu0 0.0
    %1265 = vmatpush.msra.mxu0 0.0
    %1266 = vmatpush.msra.mxu0 0.0
    %1267 = vmatpush.msra.mxu0 0.0
    %1268 = vmatpush.msra.mxu0 0.0
    %1269 = vmatpush.msra.mxu0 0.0
    %1270 = vmatpush.msra.mxu0 0.0
    %1271 = vmatpush.msra.mxu0 0.0
    %1272 = vmatpush.msra.mxu0 0.0
    %1273 = vmatpush.msra.mxu0 0.0
    %1274 = vmatpush.msra.mxu0 0.0
    %1275 = vmatpush.msra.mxu0 0.0
    %1276 = vmatpush.msra.mxu0 %v1038
    %1277 = vmatmul.f32.gmra.mxu0 %v1259
    %v1278 = vpop.f32.mrf.mxu0
    %v1279 = vadd.f32 0.0, %v1278
    %1280 = vdwg.mxu0
    %1281 = vmatpush.msra.mxu0 0.0
    %1282 = vmatpush.msra.mxu0 0.0
    %1283 = vmatpush.msra.mxu0 0.0
    %1284 = vmatpush.msra.mxu0 0.0
    %1285 = vmatpush.msra.mxu0 0.0
    %1286 = vmatpush.msra.mxu0 0.0
    %1287 = vmatpush.msra.mxu0 0.0
    %1288 = vmatpush.msra.mxu0 0.0
    %1289 = vmatpush.msra.mxu0 0.0
    %1290 = vmatpush.msra.mxu0 0.0
    %1291 = vmatpush.msra.mxu0 0.0
    %1292 = vmatpush.msra.mxu0 0.0
    %1293 = vmatpush.msra.mxu0 0.0
    %1294 = vmatpush.msra.mxu0 0.0
    %1295 = vmatpush.msra.mxu0 0.0
    %1296 = vmatpush.msra.mxu0 %v1039
    %1297 = vmatmul.f32.gmra.mxu0 %v1259
    %v1298 = vpop.f32.mrf.mxu0
    %v1299 = vadd.f32 0.0, %v1298
    %1300 = vdwg.mxu0
    %1301 = vmatpush.msra.mxu0 0.0
    %1302 = vmatpush.msra.mxu0 0.0
    %1303 = vmatpush.msra.mxu0 0.0
    %1304 = vmatpush.msra.mxu0 0.0
    %1305 = vmatpush.msra.mxu0 0.0
    %1306 = vmatpush.msra.mxu0 0.0
    %1307 = vmatpush.msra.mxu0 0.0
    %1308 = vmatpush.msra.mxu0 0.0
    %1309 = vmatpush.msra.mxu0 0.0
    %1310 = vmatpush.msra.mxu0 0.0
    %1311 = vmatpush.msra.mxu0 0.0
    %1312 = vmatpush.msra.mxu0 0.0
    %1313 = vmatpush.msra.mxu0 0.0
    %1314 = vmatpush.msra.mxu0 0.0
    %1315 = vmatpush.msra.mxu0 0.0
    %1316 = vmatpush.msra.mxu0 %v1040
    %1317 = vmatmul.f32.gmra.mxu0 %v1259
    %v1318 = vpop.f32.mrf.mxu0
    %v1319 = vadd.f32 0.0, %v1318
    %1320 = vdwg.mxu0
    %1321 = vmatpush.msra.mxu0 0.0
    %1322 = vmatpush.msra.mxu0 0.0
    %1323 = vmatpush.msra.mxu0 0.0
    %1324 = vmatpush.msra.mxu0 0.0
    %1325 = vmatpush.msra.mxu0 0.0
    %1326 = vmatpush.msra.mxu0 0.0
    %1327 = vmatpush.msra.mxu0 0.0
    %1328 = vmatpush.msra.mxu0 0.0
    %1329 = vmatpush.msra.mxu0 0.0
    %1330 = vmatpush.msra.mxu0 0.0
    %1331 = vmatpush.msra.mxu0 0.0
    %1332 = vmatpush.msra.mxu0 0.0
    %1333 = vmatpush.msra.mxu0 0.0
    %1334 = vmatpush.msra.mxu0 0.0
    %1335 = vmatpush.msra.mxu0 0.0
    %1336 = vmatpush.msra.mxu0 %v1041
    %1337 = vmatmul.f32.gmra.mxu0 %v1259
    %v1338 = vpop.f32.mrf.mxu0
    %v1339 = vadd.f32 0.0, %v1338
    %1340 = vdwg.mxu0
    %v1341 = vperm.slane %v1279, 0
    %v1342 = vperm.slane %v1299, 0
    %v1343 = vperm.slane %v1319, 0
    %v1344 = vperm.slane %v1339, 0
    %v1345 = vmul.f32 %v1130, %v1341
    %v1346 = vmul.f32 %v1131, %v1342
    %v1347 = vmul.f32 %v1132, %v1343
    %v1348 = vmul.f32 %v1133, %v1344
    %v1349 = vld [vmem:[%s9] sm:$0xf]
    %v1351 = vperm.slane %v1349, 0
    %v1352 = vperm.slane %v1349, 1
    %v1353 = vperm.slane %v1349, 2
    %v1354 = vperm.slane %v1349, 3
    %v1359 = vmul.f32 %v1345, %v1351
    %v1360 = vmul.f32 %v1346, %v1352
    %v1361 = vmul.f32 %v1347, %v1353
    %v1362 = vmul.f32 %v1348, %v1354
    %v1363 = vld [vmem:[%s10] sm:$0xf]
    %v1365 = vperm.slane %v1363, 0
    %v1366 = vperm.slane %v1363, 1
    %v1367 = vperm.slane %v1363, 2
    %v1368 = vperm.slane %v1363, 3
    %v1373 = vadd.f32 %v1359, %v1365
    %v1374 = vadd.f32 %v1360, %v1366
    %v1375 = vadd.f32 %v1361, %v1367
    %v1376 = vadd.f32 %v1362, %v1368
    %v1377 = vmax.f32 %v1373, 0.0
    %v1378 = vmax.f32 %v1374, 0.0
    %v1379 = vmax.f32 %v1375, 0.0
    %v1380 = vmax.f32 %v1376, 0.0
    %v1381 = vpack.c.bf16 %v1377, %v1377
    %v1382 = vpack.c.bf16 %v1378, %v1378
    %v1383 = vpack.c.bf16 %v1379, %v1379
    %v1384 = vpack.c.bf16 %v1380, %v1380
    %v1385 = vld [vmem:[#allocation2] sm:$0xff]
    %v1386 = vld [vmem:[#allocation2 + $0x8] sm:$0xff]
    %v1387 = vld [vmem:[#allocation2 + $0x10] sm:$0xff]
    %v1388 = vld [vmem:[#allocation2 + $0x18] sm:$0xff]
    %v1389 = vld [vmem:[#allocation2 + $0x20] sm:$0xff]
    %v1390 = vld [vmem:[#allocation2 + $0x28] sm:$0xff]
    %v1391 = vld [vmem:[#allocation2 + $0x30] sm:$0xff]
    %v1392 = vld [vmem:[#allocation2 + $0x38] sm:$0xff]
    %v1393 = vld [vmem:[#allocation2 + $0x40] sm:$0xff]
    %v1394 = vld [vmem:[#allocation2 + $0x48] sm:$0xff]
    %v1395 = vld [vmem:[#allocation2 + $0x50] sm:$0xff]
    %v1396 = vld [vmem:[#allocation2 + $0x58] sm:$0xff]
    %v1397 = vld [vmem:[#allocation2 + $0x60] sm:$0xff]
    %v1398 = vld [vmem:[#allocation2 + $0x68] sm:$0xff]
    %v1399 = vld [vmem:[#allocation2 + $0x70] sm:$0xff]
    %v1400 = vld [vmem:[#allocation2 + $0x78] sm:$0xff]
    %v1401 = vld [vmem:[#allocation2 + $0x80] sm:$0xff]
    %v1402 = vld [vmem:[#allocation2 + $0x88] sm:$0xff]
    %v1403 = vld [vmem:[#allocation2 + $0x90] sm:$0xff]
    %v1404 = vld [vmem:[#allocation2 + $0x98] sm:$0xff]
    %v1405 = vld [vmem:[#allocation2 + $0xa0] sm:$0xff]
    %v1406 = vld [vmem:[#allocation2 + $0xa8] sm:$0xff]
    %v1407 = vld [vmem:[#allocation2 + $0xb0] sm:$0xff]
    %v1408 = vld [vmem:[#allocation2 + $0xb8] sm:$0xff]
    %v1409 = vld [vmem:[#allocation2 + $0xc0] sm:$0xff]
    %v1410 = vld [vmem:[#allocation2 + $0xc8] sm:$0xff]
    %v1411 = vld [vmem:[#allocation2 + $0xd0] sm:$0xff]
    %v1412 = vld [vmem:[#allocation2 + $0xd8] sm:$0xff]
    %v1413 = vld [vmem:[#allocation2 + $0xe0] sm:$0xff]
    %v1414 = vld [vmem:[#allocation2 + $0xe8] sm:$0xff]
    %v1415 = vld [vmem:[#allocation2 + $0xf0] sm:$0xff]
    %v1416 = vld [vmem:[#allocation2 + $0xf8] sm:$0xff]
    %v1417 = vld [vmem:[#allocation2 + $0x100] sm:$0xff]
    %v1418 = vld [vmem:[#allocation2 + $0x108] sm:$0xff]
    %v1419 = vld [vmem:[#allocation2 + $0x110] sm:$0xff]
    %v1420 = vld [vmem:[#allocation2 + $0x118] sm:$0xff]
    %v1421 = vld [vmem:[#allocation2 + $0x120] sm:$0xff]
    %v1422 = vld [vmem:[#allocation2 + $0x128] sm:$0xff]
    %v1423 = vld [vmem:[#allocation2 + $0x130] sm:$0xff]
    %v1424 = vld [vmem:[#allocation2 + $0x138] sm:$0xff]
    %v1425 = vld [vmem:[#allocation2 + $0x140] sm:$0xff]
    %v1426 = vld [vmem:[#allocation2 + $0x148] sm:$0xff]
    %v1427 = vld [vmem:[#allocation2 + $0x150] sm:$0xff]
    %v1428 = vld [vmem:[#allocation2 + $0x158] sm:$0xff]
    %v1429 = vld [vmem:[#allocation2 + $0x160] sm:$0xff]
    %v1430 = vld [vmem:[#allocation2 + $0x168] sm:$0xff]
    %v1431 = vld [vmem:[#allocation2 + $0x170] sm:$0xff]
    %v1432 = vld [vmem:[#allocation2 + $0x178] sm:$0xff]
    %v1433 = vld [vmem:[#allocation2 + $0x180] sm:$0xff]
    %v1434 = vld [vmem:[#allocation2 + $0x188] sm:$0xff]
    %v1435 = vld [vmem:[#allocation2 + $0x190] sm:$0xff]
    %v1436 = vld [vmem:[#allocation2 + $0x198] sm:$0xff]
    %v1437 = vld [vmem:[#allocation2 + $0x1a0] sm:$0xff]
    %v1438 = vld [vmem:[#allocation2 + $0x1a8] sm:$0xff]
    %v1439 = vld [vmem:[#allocation2 + $0x1b0] sm:$0xff]
    %v1440 = vld [vmem:[#allocation2 + $0x1b8] sm:$0xff]
    %v1441 = vld [vmem:[#allocation2 + $0x1c0] sm:$0xff]
    %v1442 = vld [vmem:[#allocation2 + $0x1c8] sm:$0xff]
    %v1443 = vld [vmem:[#allocation2 + $0x1d0] sm:$0xff]
    %v1444 = vld [vmem:[#allocation2 + $0x1d8] sm:$0xff]
    %v1445 = vld [vmem:[#allocation2 + $0x1e0] sm:$0xff]
    %v1446 = vld [vmem:[#allocation2 + $0x1e8] sm:$0xff]
    %v1447 = vld [vmem:[#allocation2 + $0x1f0] sm:$0xff]
    %v1448 = vld [vmem:[#allocation2 + $0x1f8] sm:$0xff]
    %v1449 = vld [vmem:[#allocation2 + $0x200] sm:$0xff]
    %v1450 = vld [vmem:[#allocation2 + $0x208] sm:$0xff]
    %v1451 = vld [vmem:[#allocation2 + $0x210] sm:$0xff]
    %v1452 = vld [vmem:[#allocation2 + $0x218] sm:$0xff]
    %v1453 = vld [vmem:[#allocation2 + $0x220] sm:$0xff]
    %v1454 = vld [vmem:[#allocation2 + $0x228] sm:$0xff]
    %v1455 = vld [vmem:[#allocation2 + $0x230] sm:$0xff]
    %v1456 = vld [vmem:[#allocation2 + $0x238] sm:$0xff]
    %v1457 = vld [vmem:[#allocation2 + $0x240] sm:$0xff]
    %v1458 = vld [vmem:[#allocation2 + $0x248] sm:$0xff]
    %v1459 = vld [vmem:[#allocation2 + $0x250] sm:$0xff]
    %v1460 = vld [vmem:[#allocation2 + $0x258] sm:$0xff]
    %v1461 = vld [vmem:[#allocation2 + $0x260] sm:$0xff]
    %v1462 = vld [vmem:[#allocation2 + $0x268] sm:$0xff]
    %v1463 = vld [vmem:[#allocation2 + $0x270] sm:$0xff]
    %v1464 = vld [vmem:[#allocation2 + $0x278] sm:$0xff]
    %v1465 = vld [vmem:[#allocation2 + $0x280] sm:$0xff]
    %v1466 = vld [vmem:[#allocation2 + $0x288] sm:$0xff]
    %v1467 = vld [vmem:[#allocation2 + $0x290] sm:$0xff]
    %v1468 = vld [vmem:[#allocation2 + $0x298] sm:$0xff]
    %v1469 = vld [vmem:[#allocation2 + $0x2a0] sm:$0xff]
    %v1470 = vld [vmem:[#allocation2 + $0x2a8] sm:$0xff]
    %v1471 = vld [vmem:[#allocation2 + $0x2b0] sm:$0xff]
    %v1472 = vld [vmem:[#allocation2 + $0x2b8] sm:$0xff]
    %v1473 = vld [vmem:[#allocation2 + $0x2c0] sm:$0xff]
    %v1474 = vld [vmem:[#allocation2 + $0x2c8] sm:$0xff]
    %v1475 = vld [vmem:[#allocation2 + $0x2d0] sm:$0xff]
    %v1476 = vld [vmem:[#allocation2 + $0x2d8] sm:$0xff]
    %v1477 = vld [vmem:[#allocation2 + $0x2e0] sm:$0xff]
    %v1478 = vld [vmem:[#allocation2 + $0x2e8] sm:$0xff]
    %v1479 = vld [vmem:[#allocation2 + $0x2f0] sm:$0xff]
    %v1480 = vld [vmem:[#allocation2 + $0x2f8] sm:$0xff]
    %v1481 = vld [vmem:[#allocation2 + $0x300] sm:$0xff]
    %v1482 = vld [vmem:[#allocation2 + $0x308] sm:$0xff]
    %v1483 = vld [vmem:[#allocation2 + $0x310] sm:$0xff]
    %v1484 = vld [vmem:[#allocation2 + $0x318] sm:$0xff]
    %v1485 = vld [vmem:[#allocation2 + $0x320] sm:$0xff]
    %v1486 = vld [vmem:[#allocation2 + $0x328] sm:$0xff]
    %v1487 = vld [vmem:[#allocation2 + $0x330] sm:$0xff]
    %v1488 = vld [vmem:[#allocation2 + $0x338] sm:$0xff]
    %v1489 = vld [vmem:[#allocation2 + $0x340] sm:$0xff]
    %v1490 = vld [vmem:[#allocation2 + $0x348] sm:$0xff]
    %v1491 = vld [vmem:[#allocation2 + $0x350] sm:$0xff]
    %v1492 = vld [vmem:[#allocation2 + $0x358] sm:$0xff]
    %v1493 = vld [vmem:[#allocation2 + $0x360] sm:$0xff]
    %v1494 = vld [vmem:[#allocation2 + $0x368] sm:$0xff]
    %v1495 = vld [vmem:[#allocation2 + $0x370] sm:$0xff]
    %v1496 = vld [vmem:[#allocation2 + $0x378] sm:$0xff]
    %v1497 = vld [vmem:[#allocation2 + $0x380] sm:$0xff]
    %v1498 = vld [vmem:[#allocation2 + $0x388] sm:$0xff]
    %v1499 = vld [vmem:[#allocation2 + $0x390] sm:$0xff]
    %v1500 = vld [vmem:[#allocation2 + $0x398] sm:$0xff]
    %v1501 = vld [vmem:[#allocation2 + $0x3a0] sm:$0xff]
    %v1502 = vld [vmem:[#allocation2 + $0x3a8] sm:$0xff]
    %v1503 = vld [vmem:[#allocation2 + $0x3b0] sm:$0xff]
    %v1504 = vld [vmem:[#allocation2 + $0x3b8] sm:$0xff]
    %v1505 = vld [vmem:[#allocation2 + $0x3c0] sm:$0xff]
    %v1506 = vld [vmem:[#allocation2 + $0x3c8] sm:$0xff]
    %v1507 = vld [vmem:[#allocation2 + $0x3d0] sm:$0xff]
    %v1508 = vld [vmem:[#allocation2 + $0x3d8] sm:$0xff]
    %v1509 = vld [vmem:[#allocation2 + $0x3e0] sm:$0xff]
    %v1510 = vld [vmem:[#allocation2 + $0x3e8] sm:$0xff]
    %v1511 = vld [vmem:[#allocation2 + $0x3f0] sm:$0xff]
    %v1512 = vld [vmem:[#allocation2 + $0x3f8] sm:$0xff]
    %v1513 = vld [vmem:[#allocation2 + $0x400] sm:$0xff]
    %v1514 = vld [vmem:[#allocation2 + $0x408] sm:$0xff]
    %v1515 = vld [vmem:[#allocation2 + $0x410] sm:$0xff]
    %v1516 = vld [vmem:[#allocation2 + $0x418] sm:$0xff]
    %v1517 = vld [vmem:[#allocation2 + $0x420] sm:$0xff]
    %v1518 = vld [vmem:[#allocation2 + $0x428] sm:$0xff]
    %v1519 = vld [vmem:[#allocation2 + $0x430] sm:$0xff]
    %v1520 = vld [vmem:[#allocation2 + $0x438] sm:$0xff]
    %v1521 = vld [vmem:[#allocation2 + $0x440] sm:$0xff]
    %v1522 = vld [vmem:[#allocation2 + $0x448] sm:$0xff]
    %v1523 = vld [vmem:[#allocation2 + $0x450] sm:$0xff]
    %v1524 = vld [vmem:[#allocation2 + $0x458] sm:$0xff]
    %v1525 = vld [vmem:[#allocation2 + $0x460] sm:$0xff]
    %v1526 = vld [vmem:[#allocation2 + $0x468] sm:$0xff]
    %v1527 = vld [vmem:[#allocation2 + $0x470] sm:$0xff]
    %v1528 = vld [vmem:[#allocation2 + $0x478] sm:$0xff]
    %v1529 = vld [vmem:[#allocation2 + $0x480] sm:$0xff]
    %v1530 = vld [vmem:[#allocation2 + $0x488] sm:$0xff]
    %v1531 = vld [vmem:[#allocation2 + $0x490] sm:$0xff]
    %v1532 = vld [vmem:[#allocation2 + $0x498] sm:$0xff]
    %v1533 = vld [vmem:[#allocation2 + $0x4a0] sm:$0xff]
    %v1534 = vld [vmem:[#allocation2 + $0x4a8] sm:$0xff]
    %v1535 = vld [vmem:[#allocation2 + $0x4b0] sm:$0xff]
    %v1536 = vld [vmem:[#allocation2 + $0x4b8] sm:$0xff]
    %v1537 = vld [vmem:[#allocation2 + $0x4c0] sm:$0xff]
    %v1538 = vld [vmem:[#allocation2 + $0x4c8] sm:$0xff]
    %v1539 = vld [vmem:[#allocation2 + $0x4d0] sm:$0xff]
    %v1540 = vld [vmem:[#allocation2 + $0x4d8] sm:$0xff]
    %v1541 = vld [vmem:[#allocation2 + $0x4e0] sm:$0xff]
    %v1542 = vld [vmem:[#allocation2 + $0x4e8] sm:$0xff]
    %v1543 = vld [vmem:[#allocation2 + $0x4f0] sm:$0xff]
    %v1544 = vld [vmem:[#allocation2 + $0x4f8] sm:$0xff]
    %v1545 = vld [vmem:[#allocation2 + $0x500] sm:$0xff]
    %v1546 = vld [vmem:[#allocation2 + $0x508] sm:$0xff]
    %v1547 = vld [vmem:[#allocation2 + $0x510] sm:$0xff]
    %v1548 = vld [vmem:[#allocation2 + $0x518] sm:$0xff]
    %v1549 = vld [vmem:[#allocation2 + $0x520] sm:$0xff]
    %v1550 = vld [vmem:[#allocation2 + $0x528] sm:$0xff]
    %v1551 = vld [vmem:[#allocation2 + $0x530] sm:$0xff]
    %v1552 = vld [vmem:[#allocation2 + $0x538] sm:$0xff]
    %v1553 = vld [vmem:[#allocation2 + $0x540] sm:$0xff]
    %v1554 = vld [vmem:[#allocation2 + $0x548] sm:$0xff]
    %v1555 = vld [vmem:[#allocation2 + $0x550] sm:$0xff]
    %v1556 = vld [vmem:[#allocation2 + $0x558] sm:$0xff]
    %v1557 = vld [vmem:[#allocation2 + $0x560] sm:$0xff]
    %v1558 = vld [vmem:[#allocation2 + $0x568] sm:$0xff]
    %v1559 = vld [vmem:[#allocation2 + $0x570] sm:$0xff]
    %v1560 = vld [vmem:[#allocation2 + $0x578] sm:$0xff]
    %v1561 = vld [vmem:[#allocation2 + $0x580] sm:$0xff]
    %v1562 = vld [vmem:[#allocation2 + $0x588] sm:$0xff]
    %v1563 = vld [vmem:[#allocation2 + $0x590] sm:$0xff]
    %v1564 = vld [vmem:[#allocation2 + $0x598] sm:$0xff]
    %v1565 = vld [vmem:[#allocation2 + $0x5a0] sm:$0xff]
    %v1566 = vld [vmem:[#allocation2 + $0x5a8] sm:$0xff]
    %v1567 = vld [vmem:[#allocation2 + $0x5b0] sm:$0xff]
    %v1568 = vld [vmem:[#allocation2 + $0x5b8] sm:$0xff]
    %v1569 = vld [vmem:[#allocation2 + $0x5c0] sm:$0xff]
    %v1570 = vld [vmem:[#allocation2 + $0x5c8] sm:$0xff]
    %v1571 = vld [vmem:[#allocation2 + $0x5d0] sm:$0xff]
    %v1572 = vld [vmem:[#allocation2 + $0x5d8] sm:$0xff]
    %v1573 = vld [vmem:[#allocation2 + $0x5e0] sm:$0xff]
    %v1574 = vld [vmem:[#allocation2 + $0x5e8] sm:$0xff]
    %v1575 = vld [vmem:[#allocation2 + $0x5f0] sm:$0xff]
    %v1576 = vld [vmem:[#allocation2 + $0x5f8] sm:$0xff]
    %v1769 = vunpack.c.l.b16 %v1385
    %v1770 = vunpack.c.h.b16 %v1385
    %v1771 = vunpack.c.l.b16 %v1386
    %v1772 = vunpack.c.h.b16 %v1386
    %v1773 = vunpack.c.l.b16 %v1387
    %v1774 = vunpack.c.h.b16 %v1387
    %v1775 = vunpack.c.l.b16 %v1388
    %v1776 = vunpack.c.h.b16 %v1388
    %v1777 = vunpack.c.l.b16 %v1389
    %v1778 = vunpack.c.h.b16 %v1389
    %v1779 = vunpack.c.l.b16 %v1390
    %v1780 = vunpack.c.h.b16 %v1390
    %v1781 = vunpack.c.l.b16 %v1391
    %v1782 = vunpack.c.h.b16 %v1391
    %v1783 = vunpack.c.l.b16 %v1392
    %v1784 = vunpack.c.h.b16 %v1392
    %v1785 = vunpack.c.l.b16 %v1393
    %v1786 = vunpack.c.h.b16 %v1393
    %v1787 = vunpack.c.l.b16 %v1394
    %v1788 = vunpack.c.h.b16 %v1394
    %v1789 = vunpack.c.l.b16 %v1395
    %v1790 = vunpack.c.h.b16 %v1395
    %v1791 = vunpack.c.l.b16 %v1396
    %v1792 = vunpack.c.h.b16 %v1396
    %v1793 = vunpack.c.l.b16 %v1397
    %v1794 = vunpack.c.h.b16 %v1397
    %v1795 = vunpack.c.l.b16 %v1398
    %v1796 = vunpack.c.h.b16 %v1398
    %v1797 = vunpack.c.l.b16 %v1399
    %v1798 = vunpack.c.h.b16 %v1399
    %v1799 = vunpack.c.l.b16 %v1400
    %v1800 = vunpack.c.h.b16 %v1400
    %v1801 = vunpack.c.l.b16 %v1401
    %v1802 = vunpack.c.h.b16 %v1401
    %v1803 = vunpack.c.l.b16 %v1402
    %v1804 = vunpack.c.h.b16 %v1402
    %v1805 = vunpack.c.l.b16 %v1403
    %v1806 = vunpack.c.h.b16 %v1403
    %v1807 = vunpack.c.l.b16 %v1404
    %v1808 = vunpack.c.h.b16 %v1404
    %v1809 = vunpack.c.l.b16 %v1405
    %v1810 = vunpack.c.h.b16 %v1405
    %v1811 = vunpack.c.l.b16 %v1406
    %v1812 = vunpack.c.h.b16 %v1406
    %v1813 = vunpack.c.l.b16 %v1407
    %v1814 = vunpack.c.h.b16 %v1407
    %v1815 = vunpack.c.l.b16 %v1408
    %v1816 = vunpack.c.h.b16 %v1408
    %v1817 = vunpack.c.l.b16 %v1409
    %v1818 = vunpack.c.h.b16 %v1409
    %v1819 = vunpack.c.l.b16 %v1410
    %v1820 = vunpack.c.h.b16 %v1410
    %v1821 = vunpack.c.l.b16 %v1411
    %v1822 = vunpack.c.h.b16 %v1411
    %v1823 = vunpack.c.l.b16 %v1412
    %v1824 = vunpack.c.h.b16 %v1412
    %v1825 = vunpack.c.l.b16 %v1413
    %v1826 = vunpack.c.h.b16 %v1413
    %v1827 = vunpack.c.l.b16 %v1414
    %v1828 = vunpack.c.h.b16 %v1414
    %v1829 = vunpack.c.l.b16 %v1415
    %v1830 = vunpack.c.h.b16 %v1415
    %v1831 = vunpack.c.l.b16 %v1416
    %v1832 = vunpack.c.h.b16 %v1416
    %v1833 = vunpack.c.l.b16 %v1417
    %v1834 = vunpack.c.h.b16 %v1417
    %v1835 = vunpack.c.l.b16 %v1418
    %v1836 = vunpack.c.h.b16 %v1418
    %v1837 = vunpack.c.l.b16 %v1419
    %v1838 = vunpack.c.h.b16 %v1419
    %v1839 = vunpack.c.l.b16 %v1420
    %v1840 = vunpack.c.h.b16 %v1420
    %v1841 = vunpack.c.l.b16 %v1421
    %v1842 = vunpack.c.h.b16 %v1421
    %v1843 = vunpack.c.l.b16 %v1422
    %v1844 = vunpack.c.h.b16 %v1422
    %v1845 = vunpack.c.l.b16 %v1423
    %v1846 = vunpack.c.h.b16 %v1423
    %v1847 = vunpack.c.l.b16 %v1424
    %v1848 = vunpack.c.h.b16 %v1424
    %v1849 = vunpack.c.l.b16 %v1425
    %v1850 = vunpack.c.h.b16 %v1425
    %v1851 = vunpack.c.l.b16 %v1426
    %v1852 = vunpack.c.h.b16 %v1426
    %v1853 = vunpack.c.l.b16 %v1427
    %v1854 = vunpack.c.h.b16 %v1427
    %v1855 = vunpack.c.l.b16 %v1428
    %v1856 = vunpack.c.h.b16 %v1428
    %v1857 = vunpack.c.l.b16 %v1429
    %v1858 = vunpack.c.h.b16 %v1429
    %v1859 = vunpack.c.l.b16 %v1430
    %v1860 = vunpack.c.h.b16 %v1430
    %v1861 = vunpack.c.l.b16 %v1431
    %v1862 = vunpack.c.h.b16 %v1431
    %v1863 = vunpack.c.l.b16 %v1432
    %v1864 = vunpack.c.h.b16 %v1432
    %v1865 = vunpack.c.l.b16 %v1433
    %v1866 = vunpack.c.h.b16 %v1433
    %v1867 = vunpack.c.l.b16 %v1434
    %v1868 = vunpack.c.h.b16 %v1434
    %v1869 = vunpack.c.l.b16 %v1435
    %v1870 = vunpack.c.h.b16 %v1435
    %v1871 = vunpack.c.l.b16 %v1436
    %v1872 = vunpack.c.h.b16 %v1436
    %v1873 = vunpack.c.l.b16 %v1437
    %v1874 = vunpack.c.h.b16 %v1437
    %v1875 = vunpack.c.l.b16 %v1438
    %v1876 = vunpack.c.h.b16 %v1438
    %v1877 = vunpack.c.l.b16 %v1439
    %v1878 = vunpack.c.h.b16 %v1439
    %v1879 = vunpack.c.l.b16 %v1440
    %v1880 = vunpack.c.h.b16 %v1440
    %v1881 = vunpack.c.l.b16 %v1441
    %v1882 = vunpack.c.h.b16 %v1441
    %v1883 = vunpack.c.l.b16 %v1442
    %v1884 = vunpack.c.h.b16 %v1442
    %v1885 = vunpack.c.l.b16 %v1443
    %v1886 = vunpack.c.h.b16 %v1443
    %v1887 = vunpack.c.l.b16 %v1444
    %v1888 = vunpack.c.h.b16 %v1444
    %v1889 = vunpack.c.l.b16 %v1445
    %v1890 = vunpack.c.h.b16 %v1445
    %v1891 = vunpack.c.l.b16 %v1446
    %v1892 = vunpack.c.h.b16 %v1446
    %v1893 = vunpack.c.l.b16 %v1447
    %v1894 = vunpack.c.h.b16 %v1447
    %v1895 = vunpack.c.l.b16 %v1448
    %v1896 = vunpack.c.h.b16 %v1448
    %v1897 = vunpack.c.l.b16 %v1449
    %v1898 = vunpack.c.h.b16 %v1449
    %v1899 = vunpack.c.l.b16 %v1450
    %v1900 = vunpack.c.h.b16 %v1450
    %v1901 = vunpack.c.l.b16 %v1451
    %v1902 = vunpack.c.h.b16 %v1451
    %v1903 = vunpack.c.l.b16 %v1452
    %v1904 = vunpack.c.h.b16 %v1452
    %v1905 = vunpack.c.l.b16 %v1453
    %v1906 = vunpack.c.h.b16 %v1453
    %v1907 = vunpack.c.l.b16 %v1454
    %v1908 = vunpack.c.h.b16 %v1454
    %v1909 = vunpack.c.l.b16 %v1455
    %v1910 = vunpack.c.h.b16 %v1455
    %v1911 = vunpack.c.l.b16 %v1456
    %v1912 = vunpack.c.h.b16 %v1456
    %v1913 = vunpack.c.l.b16 %v1457
    %v1914 = vunpack.c.h.b16 %v1457
    %v1915 = vunpack.c.l.b16 %v1458
    %v1916 = vunpack.c.h.b16 %v1458
    %v1917 = vunpack.c.l.b16 %v1459
    %v1918 = vunpack.c.h.b16 %v1459
    %v1919 = vunpack.c.l.b16 %v1460
    %v1920 = vunpack.c.h.b16 %v1460
    %v1921 = vunpack.c.l.b16 %v1461
    %v1922 = vunpack.c.h.b16 %v1461
    %v1923 = vunpack.c.l.b16 %v1462
    %v1924 = vunpack.c.h.b16 %v1462
    %v1925 = vunpack.c.l.b16 %v1463
    %v1926 = vunpack.c.h.b16 %v1463
    %v1927 = vunpack.c.l.b16 %v1464
    %v1928 = vunpack.c.h.b16 %v1464
    %v1929 = vunpack.c.l.b16 %v1465
    %v1930 = vunpack.c.h.b16 %v1465
    %v1931 = vunpack.c.l.b16 %v1466
    %v1932 = vunpack.c.h.b16 %v1466
    %v1933 = vunpack.c.l.b16 %v1467
    %v1934 = vunpack.c.h.b16 %v1467
    %v1935 = vunpack.c.l.b16 %v1468
    %v1936 = vunpack.c.h.b16 %v1468
    %v1937 = vunpack.c.l.b16 %v1469
    %v1938 = vunpack.c.h.b16 %v1469
    %v1939 = vunpack.c.l.b16 %v1470
    %v1940 = vunpack.c.h.b16 %v1470
    %v1941 = vunpack.c.l.b16 %v1471
    %v1942 = vunpack.c.h.b16 %v1471
    %v1943 = vunpack.c.l.b16 %v1472
    %v1944 = vunpack.c.h.b16 %v1472
    %v1945 = vunpack.c.l.b16 %v1473
    %v1946 = vunpack.c.h.b16 %v1473
    %v1947 = vunpack.c.l.b16 %v1474
    %v1948 = vunpack.c.h.b16 %v1474
    %v1949 = vunpack.c.l.b16 %v1475
    %v1950 = vunpack.c.h.b16 %v1475
    %v1951 = vunpack.c.l.b16 %v1476
    %v1952 = vunpack.c.h.b16 %v1476
    %v1953 = vunpack.c.l.b16 %v1477
    %v1954 = vunpack.c.h.b16 %v1477
    %v1955 = vunpack.c.l.b16 %v1478
    %v1956 = vunpack.c.h.b16 %v1478
    %v1957 = vunpack.c.l.b16 %v1479
    %v1958 = vunpack.c.h.b16 %v1479
    %v1959 = vunpack.c.l.b16 %v1480
    %v1960 = vunpack.c.h.b16 %v1480
    %v1961 = vunpack.c.l.b16 %v1481
    %v1962 = vunpack.c.h.b16 %v1481
    %v1963 = vunpack.c.l.b16 %v1482
    %v1964 = vunpack.c.h.b16 %v1482
    %v1965 = vunpack.c.l.b16 %v1483
    %v1966 = vunpack.c.h.b16 %v1483
    %v1967 = vunpack.c.l.b16 %v1484
    %v1968 = vunpack.c.h.b16 %v1484
    %v1969 = vunpack.c.l.b16 %v1485
    %v1970 = vunpack.c.h.b16 %v1485
    %v1971 = vunpack.c.l.b16 %v1486
    %v1972 = vunpack.c.h.b16 %v1486
    %v1973 = vunpack.c.l.b16 %v1487
    %v1974 = vunpack.c.h.b16 %v1487
    %v1975 = vunpack.c.l.b16 %v1488
    %v1976 = vunpack.c.h.b16 %v1488
    %v1977 = vunpack.c.l.b16 %v1489
    %v1978 = vunpack.c.h.b16 %v1489
    %v1979 = vunpack.c.l.b16 %v1490
    %v1980 = vunpack.c.h.b16 %v1490
    %v1981 = vunpack.c.l.b16 %v1491
    %v1982 = vunpack.c.h.b16 %v1491
    %v1983 = vunpack.c.l.b16 %v1492
    %v1984 = vunpack.c.h.b16 %v1492
    %v1985 = vunpack.c.l.b16 %v1493
    %v1986 = vunpack.c.h.b16 %v1493
    %v1987 = vunpack.c.l.b16 %v1494
    %v1988 = vunpack.c.h.b16 %v1494
    %v1989 = vunpack.c.l.b16 %v1495
    %v1990 = vunpack.c.h.b16 %v1495
    %v1991 = vunpack.c.l.b16 %v1496
    %v1992 = vunpack.c.h.b16 %v1496
    %v1993 = vunpack.c.l.b16 %v1497
    %v1994 = vunpack.c.h.b16 %v1497
    %v1995 = vunpack.c.l.b16 %v1498
    %v1996 = vunpack.c.h.b16 %v1498
    %v1997 = vunpack.c.l.b16 %v1499
    %v1998 = vunpack.c.h.b16 %v1499
    %v1999 = vunpack.c.l.b16 %v1500
    %v2000 = vunpack.c.h.b16 %v1500
    %v2001 = vunpack.c.l.b16 %v1501
    %v2002 = vunpack.c.h.b16 %v1501
    %v2003 = vunpack.c.l.b16 %v1502
    %v2004 = vunpack.c.h.b16 %v1502
    %v2005 = vunpack.c.l.b16 %v1503
    %v2006 = vunpack.c.h.b16 %v1503
    %v2007 = vunpack.c.l.b16 %v1504
    %v2008 = vunpack.c.h.b16 %v1504
    %v2009 = vunpack.c.l.b16 %v1505
    %v2010 = vunpack.c.h.b16 %v1505
    %v2011 = vunpack.c.l.b16 %v1506
    %v2012 = vunpack.c.h.b16 %v1506
    %v2013 = vunpack.c.l.b16 %v1507
    %v2014 = vunpack.c.h.b16 %v1507
    %v2015 = vunpack.c.l.b16 %v1508
    %v2016 = vunpack.c.h.b16 %v1508
    %v2017 = vunpack.c.l.b16 %v1509
    %v2018 = vunpack.c.h.b16 %v1509
    %v2019 = vunpack.c.l.b16 %v1510
    %v2020 = vunpack.c.h.b16 %v1510
    %v2021 = vunpack.c.l.b16 %v1511
    %v2022 = vunpack.c.h.b16 %v1511
    %v2023 = vunpack.c.l.b16 %v1512
    %v2024 = vunpack.c.h.b16 %v1512
    %v2025 = vunpack.c.l.b16 %v1513
    %v2026 = vunpack.c.h.b16 %v1513
    %v2027 = vunpack.c.l.b16 %v1514
    %v2028 = vunpack.c.h.b16 %v1514
    %v2029 = vunpack.c.l.b16 %v1515
    %v2030 = vunpack.c.h.b16 %v1515
    %v2031 = vunpack.c.l.b16 %v1516
    %v2032 = vunpack.c.h.b16 %v1516
    %v2033 = vunpack.c.l.b16 %v1517
    %v2034 = vunpack.c.h.b16 %v1517
    %v2035 = vunpack.c.l.b16 %v1518
    %v2036 = vunpack.c.h.b16 %v1518
    %v2037 = vunpack.c.l.b16 %v1519
    %v2038 = vunpack.c.h.b16 %v1519
    %v2039 = vunpack.c.l.b16 %v1520
    %v2040 = vunpack.c.h.b16 %v1520
    %v2041 = vunpack.c.l.b16 %v1521
    %v2042 = vunpack.c.h.b16 %v1521
    %v2043 = vunpack.c.l.b16 %v1522
    %v2044 = vunpack.c.h.b16 %v1522
    %v2045 = vunpack.c.l.b16 %v1523
    %v2046 = vunpack.c.h.b16 %v1523
    %v2047 = vunpack.c.l.b16 %v1524
    %v2048 = vunpack.c.h.b16 %v1524
    %v2049 = vunpack.c.l.b16 %v1525
    %v2050 = vunpack.c.h.b16 %v1525
    %v2051 = vunpack.c.l.b16 %v1526
    %v2052 = vunpack.c.h.b16 %v1526
    %v2053 = vunpack.c.l.b16 %v1527
    %v2054 = vunpack.c.h.b16 %v1527
    %v2055 = vunpack.c.l.b16 %v1528
    %v2056 = vunpack.c.h.b16 %v1528
    %v2057 = vunpack.c.l.b16 %v1529
    %v2058 = vunpack.c.h.b16 %v1529
    %v2059 = vunpack.c.l.b16 %v1530
    %v2060 = vunpack.c.h.b16 %v1530
    %v2061 = vunpack.c.l.b16 %v1531
    %v2062 = vunpack.c.h.b16 %v1531
    %v2063 = vunpack.c.l.b16 %v1532
    %v2064 = vunpack.c.h.b16 %v1532
    %v2065 = vunpack.c.l.b16 %v1533
    %v2066 = vunpack.c.h.b16 %v1533
    %v2067 = vunpack.c.l.b16 %v1534
    %v2068 = vunpack.c.h.b16 %v1534
    %v2069 = vunpack.c.l.b16 %v1535
    %v2070 = vunpack.c.h.b16 %v1535
    %v2071 = vunpack.c.l.b16 %v1536
    %v2072 = vunpack.c.h.b16 %v1536
    %v2073 = vunpack.c.l.b16 %v1537
    %v2074 = vunpack.c.h.b16 %v1537
    %v2075 = vunpack.c.l.b16 %v1538
    %v2076 = vunpack.c.h.b16 %v1538
    %v2077 = vunpack.c.l.b16 %v1539
    %v2078 = vunpack.c.h.b16 %v1539
    %v2079 = vunpack.c.l.b16 %v1540
    %v2080 = vunpack.c.h.b16 %v1540
    %v2081 = vunpack.c.l.b16 %v1541
    %v2082 = vunpack.c.h.b16 %v1541
    %v2083 = vunpack.c.l.b16 %v1542
    %v2084 = vunpack.c.h.b16 %v1542
    %v2085 = vunpack.c.l.b16 %v1543
    %v2086 = vunpack.c.h.b16 %v1543
    %v2087 = vunpack.c.l.b16 %v1544
    %v2088 = vunpack.c.h.b16 %v1544
    %v2089 = vunpack.c.l.b16 %v1545
    %v2090 = vunpack.c.h.b16 %v1545
    %v2091 = vunpack.c.l.b16 %v1546
    %v2092 = vunpack.c.h.b16 %v1546
    %v2093 = vunpack.c.l.b16 %v1547
    %v2094 = vunpack.c.h.b16 %v1547
    %v2095 = vunpack.c.l.b16 %v1548
    %v2096 = vunpack.c.h.b16 %v1548
    %v2097 = vunpack.c.l.b16 %v1549
    %v2098 = vunpack.c.h.b16 %v1549
    %v2099 = vunpack.c.l.b16 %v1550
    %v2100 = vunpack.c.h.b16 %v1550
    %v2101 = vunpack.c.l.b16 %v1551
    %v2102 = vunpack.c.h.b16 %v1551
    %v2103 = vunpack.c.l.b16 %v1552
    %v2104 = vunpack.c.h.b16 %v1552
    %v2105 = vunpack.c.l.b16 %v1553
    %v2106 = vunpack.c.h.b16 %v1553
    %v2107 = vunpack.c.l.b16 %v1554
    %v2108 = vunpack.c.h.b16 %v1554
    %v2109 = vunpack.c.l.b16 %v1555
    %v2110 = vunpack.c.h.b16 %v1555
    %v2111 = vunpack.c.l.b16 %v1556
    %v2112 = vunpack.c.h.b16 %v1556
    %v2113 = vunpack.c.l.b16 %v1557
    %v2114 = vunpack.c.h.b16 %v1557
    %v2115 = vunpack.c.l.b16 %v1558
    %v2116 = vunpack.c.h.b16 %v1558
    %v2117 = vunpack.c.l.b16 %v1559
    %v2118 = vunpack.c.h.b16 %v1559
    %v2119 = vunpack.c.l.b16 %v1560
    %v2120 = vunpack.c.h.b16 %v1560
    %v2121 = vunpack.c.l.b16 %v1561
    %v2122 = vunpack.c.h.b16 %v1561
    %v2123 = vunpack.c.l.b16 %v1562
    %v2124 = vunpack.c.h.b16 %v1562
    %v2125 = vunpack.c.l.b16 %v1563
    %v2126 = vunpack.c.h.b16 %v1563
    %v2127 = vunpack.c.l.b16 %v1564
    %v2128 = vunpack.c.h.b16 %v1564
    %v2129 = vunpack.c.l.b16 %v1565
    %v2130 = vunpack.c.h.b16 %v1565
    %v2131 = vunpack.c.l.b16 %v1566
    %v2132 = vunpack.c.h.b16 %v1566
    %v2133 = vunpack.c.l.b16 %v1567
    %v2134 = vunpack.c.h.b16 %v1567
    %v2135 = vunpack.c.l.b16 %v1568
    %v2136 = vunpack.c.h.b16 %v1568
    %v2137 = vunpack.c.l.b16 %v1569
    %v2138 = vunpack.c.h.b16 %v1569
    %v2139 = vunpack.c.l.b16 %v1570
    %v2140 = vunpack.c.h.b16 %v1570
    %v2141 = vunpack.c.l.b16 %v1571
    %v2142 = vunpack.c.h.b16 %v1571
    %v2143 = vunpack.c.l.b16 %v1572
    %v2144 = vunpack.c.h.b16 %v1572
    %v2145 = vunpack.c.l.b16 %v1573
    %v2146 = vunpack.c.h.b16 %v1573
    %v2147 = vunpack.c.l.b16 %v1574
    %v2148 = vunpack.c.h.b16 %v1574
    %v2149 = vunpack.c.l.b16 %v1575
    %v2150 = vunpack.c.h.b16 %v1575
    %v2151 = vunpack.c.l.b16 %v1576
    %v2152 = vunpack.c.h.b16 %v1576
    %v2153 = vpack.c.b16 %v1775, %v1769
    %v2154 = vpack.c.b16 %v1776, %v1770
    %v2155 = vpack.c.b16 %v1777, %v1771
    %v2156 = vpack.c.b16 %v1778, %v1772
    %v2157 = vpack.c.b16 %v1779, %v1773
    %v2158 = vpack.c.b16 %v1780, %v1774
    %v2159 = vpack.c.b16 %v1787, %v1781
    %v2160 = vpack.c.b16 %v1788, %v1782
    %v2161 = vpack.c.b16 %v1789, %v1783
    %v2162 = vpack.c.b16 %v1790, %v1784
    %v2163 = vpack.c.b16 %v1791, %v1785
    %v2164 = vpack.c.b16 %v1792, %v1786
    %v2165 = vpack.c.b16 %v1799, %v1793
    %v2166 = vpack.c.b16 %v1800, %v1794
    %v2167 = vpack.c.b16 %v1801, %v1795
    %v2168 = vpack.c.b16 %v1802, %v1796
    %v2169 = vpack.c.b16 %v1803, %v1797
    %v2170 = vpack.c.b16 %v1804, %v1798
    %v2171 = vpack.c.b16 %v1811, %v1805
    %v2172 = vpack.c.b16 %v1812, %v1806
    %v2173 = vpack.c.b16 %v1813, %v1807
    %v2174 = vpack.c.b16 %v1814, %v1808
    %v2175 = vpack.c.b16 %v1815, %v1809
    %v2176 = vpack.c.b16 %v1816, %v1810
    %v2177 = vpack.c.b16 %v1823, %v1817
    %v2178 = vpack.c.b16 %v1824, %v1818
    %v2179 = vpack.c.b16 %v1825, %v1819
    %v2180 = vpack.c.b16 %v1826, %v1820
    %v2181 = vpack.c.b16 %v1827, %v1821
    %v2182 = vpack.c.b16 %v1828, %v1822
    %v2183 = vpack.c.b16 %v1835, %v1829
    %v2184 = vpack.c.b16 %v1836, %v1830
    %v2185 = vpack.c.b16 %v1837, %v1831
    %v2186 = vpack.c.b16 %v1838, %v1832
    %v2187 = vpack.c.b16 %v1839, %v1833
    %v2188 = vpack.c.b16 %v1840, %v1834
    %v2189 = vpack.c.b16 %v1847, %v1841
    %v2190 = vpack.c.b16 %v1848, %v1842
    %v2191 = vpack.c.b16 %v1849, %v1843
    %v2192 = vpack.c.b16 %v1850, %v1844
    %v2193 = vpack.c.b16 %v1851, %v1845
    %v2194 = vpack.c.b16 %v1852, %v1846
    %v2195 = vpack.c.b16 %v1859, %v1853
    %v2196 = vpack.c.b16 %v1860, %v1854
    %v2197 = vpack.c.b16 %v1861, %v1855
    %v2198 = vpack.c.b16 %v1862, %v1856
    %v2199 = vpack.c.b16 %v1863, %v1857
    %v2200 = vpack.c.b16 %v1864, %v1858
    %v2201 = vpack.c.b16 %v1871, %v1865
    %v2202 = vpack.c.b16 %v1872, %v1866
    %v2203 = vpack.c.b16 %v1873, %v1867
    %v2204 = vpack.c.b16 %v1874, %v1868
    %v2205 = vpack.c.b16 %v1875, %v1869
    %v2206 = vpack.c.b16 %v1876, %v1870
    %v2207 = vpack.c.b16 %v1883, %v1877
    %v2208 = vpack.c.b16 %v1884, %v1878
    %v2209 = vpack.c.b16 %v1885, %v1879
    %v2210 = vpack.c.b16 %v1886, %v1880
    %v2211 = vpack.c.b16 %v1887, %v1881
    %v2212 = vpack.c.b16 %v1888, %v1882
    %v2213 = vpack.c.b16 %v1895, %v1889
    %v2214 = vpack.c.b16 %v1896, %v1890
    %v2215 = vpack.c.b16 %v1897, %v1891
    %v2216 = vpack.c.b16 %v1898, %v1892
    %v2217 = vpack.c.b16 %v1899, %v1893
    %v2218 = vpack.c.b16 %v1900, %v1894
    %v2219 = vpack.c.b16 %v1907, %v1901
    %v2220 = vpack.c.b16 %v1908, %v1902
    %v2221 = vpack.c.b16 %v1909, %v1903
    %v2222 = vpack.c.b16 %v1910, %v1904
    %v2223 = vpack.c.b16 %v1911, %v1905
    %v2224 = vpack.c.b16 %v1912, %v1906
    %v2225 = vpack.c.b16 %v1919, %v1913
    %v2226 = vpack.c.b16 %v1920, %v1914
    %v2227 = vpack.c.b16 %v1921, %v1915
    %v2228 = vpack.c.b16 %v1922, %v1916
    %v2229 = vpack.c.b16 %v1923, %v1917
    %v2230 = vpack.c.b16 %v1924, %v1918
    %v2231 = vpack.c.b16 %v1931, %v1925
    %v2232 = vpack.c.b16 %v1932, %v1926
    %v2233 = vpack.c.b16 %v1933, %v1927
    %v2234 = vpack.c.b16 %v1934, %v1928
    %v2235 = vpack.c.b16 %v1935, %v1929
    %v2236 = vpack.c.b16 %v1936, %v1930
    %v2237 = vpack.c.b16 %v1943, %v1937
    %v2238 = vpack.c.b16 %v1944, %v1938
    %v2239 = vpack.c.b16 %v1945, %v1939
    %v2240 = vpack.c.b16 %v1946, %v1940
    %v2241 = vpack.c.b16 %v1947, %v1941
    %v2242 = vpack.c.b16 %v1948, %v1942
    %v2243 = vpack.c.b16 %v1955, %v1949
    %v2244 = vpack.c.b16 %v1956, %v1950
    %v2245 = vpack.c.b16 %v1957, %v1951
    %v2246 = vpack.c.b16 %v1958, %v1952
    %v2247 = vpack.c.b16 %v1959, %v1953
    %v2248 = vpack.c.b16 %v1960, %v1954
    %v2249 = vpack.c.b16 %v1967, %v1961
    %v2250 = vpack.c.b16 %v1968, %v1962
    %v2251 = vpack.c.b16 %v1969, %v1963
    %v2252 = vpack.c.b16 %v1970, %v1964
    %v2253 = vpack.c.b16 %v1971, %v1965
    %v2254 = vpack.c.b16 %v1972, %v1966
    %v2255 = vpack.c.b16 %v1979, %v1973
    %v2256 = vpack.c.b16 %v1980, %v1974
    %v2257 = vpack.c.b16 %v1981, %v1975
    %v2258 = vpack.c.b16 %v1982, %v1976
    %v2259 = vpack.c.b16 %v1983, %v1977
    %v2260 = vpack.c.b16 %v1984, %v1978
    %v2261 = vpack.c.b16 %v1991, %v1985
    %v2262 = vpack.c.b16 %v1992, %v1986
    %v2263 = vpack.c.b16 %v1993, %v1987
    %v2264 = vpack.c.b16 %v1994, %v1988
    %v2265 = vpack.c.b16 %v1995, %v1989
    %v2266 = vpack.c.b16 %v1996, %v1990
    %v2267 = vpack.c.b16 %v2003, %v1997
    %v2268 = vpack.c.b16 %v2004, %v1998
    %v2269 = vpack.c.b16 %v2005, %v1999
    %v2270 = vpack.c.b16 %v2006, %v2000
    %v2271 = vpack.c.b16 %v2007, %v2001
    %v2272 = vpack.c.b16 %v2008, %v2002
    %v2273 = vpack.c.b16 %v2015, %v2009
    %v2274 = vpack.c.b16 %v2016, %v2010
    %v2275 = vpack.c.b16 %v2017, %v2011
    %v2276 = vpack.c.b16 %v2018, %v2012
    %v2277 = vpack.c.b16 %v2019, %v2013
    %v2278 = vpack.c.b16 %v2020, %v2014
    %v2279 = vpack.c.b16 %v2027, %v2021
    %v2280 = vpack.c.b16 %v2028, %v2022
    %v2281 = vpack.c.b16 %v2029, %v2023
    %v2282 = vpack.c.b16 %v2030, %v2024
    %v2283 = vpack.c.b16 %v2031, %v2025
    %v2284 = vpack.c.b16 %v2032, %v2026
    %v2285 = vpack.c.b16 %v2039, %v2033
    %v2286 = vpack.c.b16 %v2040, %v2034
    %v2287 = vpack.c.b16 %v2041, %v2035
    %v2288 = vpack.c.b16 %v2042, %v2036
    %v2289 = vpack.c.b16 %v2043, %v2037
    %v2290 = vpack.c.b16 %v2044, %v2038
    %v2291 = vpack.c.b16 %v2051, %v2045
    %v2292 = vpack.c.b16 %v2052, %v2046
    %v2293 = vpack.c.b16 %v2053, %v2047
    %v2294 = vpack.c.b16 %v2054, %v2048
    %v2295 = vpack.c.b16 %v2055, %v2049
    %v2296 = vpack.c.b16 %v2056, %v2050
    %v2297 = vpack.c.b16 %v2063, %v2057
    %v2298 = vpack.c.b16 %v2064, %v2058
    %v2299 = vpack.c.b16 %v2065, %v2059
    %v2300 = vpack.c.b16 %v2066, %v2060
    %v2301 = vpack.c.b16 %v2067, %v2061
    %v2302 = vpack.c.b16 %v2068, %v2062
    %v2303 = vpack.c.b16 %v2075, %v2069
    %v2304 = vpack.c.b16 %v2076, %v2070
    %v2305 = vpack.c.b16 %v2077, %v2071
    %v2306 = vpack.c.b16 %v2078, %v2072
    %v2307 = vpack.c.b16 %v2079, %v2073
    %v2308 = vpack.c.b16 %v2080, %v2074
    %v2309 = vpack.c.b16 %v2087, %v2081
    %v2310 = vpack.c.b16 %v2088, %v2082
    %v2311 = vpack.c.b16 %v2089, %v2083
    %v2312 = vpack.c.b16 %v2090, %v2084
    %v2313 = vpack.c.b16 %v2091, %v2085
    %v2314 = vpack.c.b16 %v2092, %v2086
    %v2315 = vpack.c.b16 %v2099, %v2093
    %v2316 = vpack.c.b16 %v2100, %v2094
    %v2317 = vpack.c.b16 %v2101, %v2095
    %v2318 = vpack.c.b16 %v2102, %v2096
    %v2319 = vpack.c.b16 %v2103, %v2097
    %v2320 = vpack.c.b16 %v2104, %v2098
    %v2321 = vpack.c.b16 %v2111, %v2105
    %v2322 = vpack.c.b16 %v2112, %v2106
    %v2323 = vpack.c.b16 %v2113, %v2107
    %v2324 = vpack.c.b16 %v2114, %v2108
    %v2325 = vpack.c.b16 %v2115, %v2109
    %v2326 = vpack.c.b16 %v2116, %v2110
    %v2327 = vpack.c.b16 %v2123, %v2117
    %v2328 = vpack.c.b16 %v2124, %v2118
    %v2329 = vpack.c.b16 %v2125, %v2119
    %v2330 = vpack.c.b16 %v2126, %v2120
    %v2331 = vpack.c.b16 %v2127, %v2121
    %v2332 = vpack.c.b16 %v2128, %v2122
    %v2333 = vpack.c.b16 %v2135, %v2129
    %v2334 = vpack.c.b16 %v2136, %v2130
    %v2335 = vpack.c.b16 %v2137, %v2131
    %v2336 = vpack.c.b16 %v2138, %v2132
    %v2337 = vpack.c.b16 %v2139, %v2133
    %v2338 = vpack.c.b16 %v2140, %v2134
    %v2339 = vpack.c.b16 %v2147, %v2141
    %v2340 = vpack.c.b16 %v2148, %v2142
    %v2341 = vpack.c.b16 %v2149, %v2143
    %v2342 = vpack.c.b16 %v2150, %v2144
    %v2343 = vpack.c.b16 %v2151, %v2145
    %v2344 = vpack.c.b16 %v2152, %v2146
    %2537 = vmatpush.bf16.msra.mxu0 %v2195
    %2538 = vmatpush.bf16.msra.mxu0 %v2189
    %2539 = vmatpush.bf16.msra.mxu0 %v2183
    %2540 = vmatpush.bf16.msra.mxu0 %v2177
    %2541 = vmatpush.bf16.msra.mxu0 %v2171
    %2542 = vmatpush.bf16.msra.mxu0 %v2165
    %2543 = vmatpush.bf16.msra.mxu0 %v2159
    %2544 = vmatpush.bf16.msra.mxu0 %v2153
    %2545 = vmatmul.bf16.gmra.mxu0 %v1381
    %v2546 = vpop.f32.mrf.mxu0
    %v2547 = vadd.f32 0.0, %v2546
    %v2548 = vpop.f32.mrf.mxu0
    %2549 = vdwg.mxu0
    %2550 = vmatpush.bf16.msra.mxu0 %v2243
    %2551 = vmatpush.bf16.msra.mxu0 %v2237
    %2552 = vmatpush.bf16.msra.mxu0 %v2231
    %2553 = vmatpush.bf16.msra.mxu0 %v2225
    %2554 = vmatpush.bf16.msra.mxu0 %v2219
    %2555 = vmatpush.bf16.msra.mxu0 %v2213
    %2556 = vmatpush.bf16.msra.mxu0 %v2207
    %2557 = vmatpush.bf16.msra.mxu0 %v2201
    %2558 = vmatmul.bf16.gmra.mxu0 %v1382
    %v2559 = vpop.f32.mrf.mxu0
    %v2560 = vadd.f32 %v2547, %v2559
    %v2561 = vpop.f32.mrf.mxu0
    %2562 = vdwg.mxu0
    %2563 = vmatpush.bf16.msra.mxu0 %v2291
    %2564 = vmatpush.bf16.msra.mxu0 %v2285
    %2565 = vmatpush.bf16.msra.mxu0 %v2279
    %2566 = vmatpush.bf16.msra.mxu0 %v2273
    %2567 = vmatpush.bf16.msra.mxu0 %v2267
    %2568 = vmatpush.bf16.msra.mxu0 %v2261
    %2569 = vmatpush.bf16.msra.mxu0 %v2255
    %2570 = vmatpush.bf16.msra.mxu0 %v2249
    %2571 = vmatmul.bf16.gmra.mxu0 %v1383
    %v2572 = vpop.f32.mrf.mxu0
    %v2573 = vadd.f32 %v2560, %v2572
    %v2574 = vpop.f32.mrf.mxu0
    %2575 = vdwg.mxu0
    %2576 = vmatpush.bf16.msra.mxu0 %v2339
    %2577 = vmatpush.bf16.msra.mxu0 %v2333
    %2578 = vmatpush.bf16.msra.mxu0 %v2327
    %2579 = vmatpush.bf16.msra.mxu0 %v2321
    %2580 = vmatpush.bf16.msra.mxu0 %v2315
    %2581 = vmatpush.bf16.msra.mxu0 %v2309
    %2582 = vmatpush.bf16.msra.mxu0 %v2303
    %2583 = vmatpush.bf16.msra.mxu0 %v2297
    %2584 = vmatmul.bf16.gmra.mxu0 %v1384
    %v2585 = vpop.f32.mrf.mxu0
    %v2586 = vadd.f32 %v2573, %v2585
    %v2587 = vpop.f32.mrf.mxu0
    %2588 = vdwg.mxu0
    %2589 = vmatpush.bf16.msra.mxu0 %v2196
    %2590 = vmatpush.bf16.msra.mxu0 %v2190
    %2591 = vmatpush.bf16.msra.mxu0 %v2184
    %2592 = vmatpush.bf16.msra.mxu0 %v2178
    %2593 = vmatpush.bf16.msra.mxu0 %v2172
    %2594 = vmatpush.bf16.msra.mxu0 %v2166
    %2595 = vmatpush.bf16.msra.mxu0 %v2160
    %2596 = vmatpush.bf16.msra.mxu0 %v2154
    %2597 = vmatmul.bf16.gmra.mxu0 %v1381
    %v2598 = vpop.f32.mrf.mxu0
    %v2599 = vadd.f32 0.0, %v2598
    %v2600 = vpop.f32.mrf.mxu0
    %2601 = vdwg.mxu0
    %2602 = vmatpush.bf16.msra.mxu0 %v2244
    %2603 = vmatpush.bf16.msra.mxu0 %v2238
    %2604 = vmatpush.bf16.msra.mxu0 %v2232
    %2605 = vmatpush.bf16.msra.mxu0 %v2226
    %2606 = vmatpush.bf16.msra.mxu0 %v2220
    %2607 = vmatpush.bf16.msra.mxu0 %v2214
    %2608 = vmatpush.bf16.msra.mxu0 %v2208
    %2609 = vmatpush.bf16.msra.mxu0 %v2202
    %2610 = vmatmul.bf16.gmra.mxu0 %v1382
    %v2611 = vpop.f32.mrf.mxu0
    %v2612 = vadd.f32 %v2599, %v2611
    %v2613 = vpop.f32.mrf.mxu0
    %2614 = vdwg.mxu0
    %2615 = vmatpush.bf16.msra.mxu0 %v2292
    %2616 = vmatpush.bf16.msra.mxu0 %v2286
    %2617 = vmatpush.bf16.msra.mxu0 %v2280
    %2618 = vmatpush.bf16.msra.mxu0 %v2274
    %2619 = vmatpush.bf16.msra.mxu0 %v2268
    %2620 = vmatpush.bf16.msra.mxu0 %v2262
    %2621 = vmatpush.bf16.msra.mxu0 %v2256
    %2622 = vmatpush.bf16.msra.mxu0 %v2250
    %2623 = vmatmul.bf16.gmra.mxu0 %v1383
    %v2624 = vpop.f32.mrf.mxu0
    %v2625 = vadd.f32 %v2612, %v2624
    %v2626 = vpop.f32.mrf.mxu0
    %2627 = vdwg.mxu0
    %2628 = vmatpush.bf16.msra.mxu0 %v2340
    %2629 = vmatpush.bf16.msra.mxu0 %v2334
    %2630 = vmatpush.bf16.msra.mxu0 %v2328
    %2631 = vmatpush.bf16.msra.mxu0 %v2322
    %2632 = vmatpush.bf16.msra.mxu0 %v2316
    %2633 = vmatpush.bf16.msra.mxu0 %v2310
    %2634 = vmatpush.bf16.msra.mxu0 %v2304
    %2635 = vmatpush.bf16.msra.mxu0 %v2298
    %2636 = vmatmul.bf16.gmra.mxu0 %v1384
    %v2637 = vpop.f32.mrf.mxu0
    %v2638 = vadd.f32 %v2625, %v2637
    %v2639 = vpop.f32.mrf.mxu0
    %2640 = vdwg.mxu0
    %2641 = vmatpush.bf16.msra.mxu0 %v2197
    %2642 = vmatpush.bf16.msra.mxu0 %v2191
    %2643 = vmatpush.bf16.msra.mxu0 %v2185
    %2644 = vmatpush.bf16.msra.mxu0 %v2179
    %2645 = vmatpush.bf16.msra.mxu0 %v2173
    %2646 = vmatpush.bf16.msra.mxu0 %v2167
    %2647 = vmatpush.bf16.msra.mxu0 %v2161
    %2648 = vmatpush.bf16.msra.mxu0 %v2155
    %2649 = vmatmul.bf16.gmra.mxu0 %v1381
    %v2650 = vpop.f32.mrf.mxu0
    %v2651 = vadd.f32 0.0, %v2650
    %v2652 = vpop.f32.mrf.mxu0
    %2653 = vdwg.mxu0
    %2654 = vmatpush.bf16.msra.mxu0 %v2245
    %2655 = vmatpush.bf16.msra.mxu0 %v2239
    %2656 = vmatpush.bf16.msra.mxu0 %v2233
    %2657 = vmatpush.bf16.msra.mxu0 %v2227
    %2658 = vmatpush.bf16.msra.mxu0 %v2221
    %2659 = vmatpush.bf16.msra.mxu0 %v2215
    %2660 = vmatpush.bf16.msra.mxu0 %v2209
    %2661 = vmatpush.bf16.msra.mxu0 %v2203
    %2662 = vmatmul.bf16.gmra.mxu0 %v1382
    %v2663 = vpop.f32.mrf.mxu0
    %v2664 = vadd.f32 %v2651, %v2663
    %v2665 = vpop.f32.mrf.mxu0
    %2666 = vdwg.mxu0
    %2667 = vmatpush.bf16.msra.mxu0 %v2293
    %2668 = vmatpush.bf16.msra.mxu0 %v2287
    %2669 = vmatpush.bf16.msra.mxu0 %v2281
    %2670 = vmatpush.bf16.msra.mxu0 %v2275
    %2671 = vmatpush.bf16.msra.mxu0 %v2269
    %2672 = vmatpush.bf16.msra.mxu0 %v2263
    %2673 = vmatpush.bf16.msra.mxu0 %v2257
    %2674 = vmatpush.bf16.msra.mxu0 %v2251
    %2675 = vmatmul.bf16.gmra.mxu0 %v1383
    %v2676 = vpop.f32.mrf.mxu0
    %v2677 = vadd.f32 %v2664, %v2676
    %v2678 = vpop.f32.mrf.mxu0
    %2679 = vdwg.mxu0
    %2680 = vmatpush.bf16.msra.mxu0 %v2341
    %2681 = vmatpush.bf16.msra.mxu0 %v2335
    %2682 = vmatpush.bf16.msra.mxu0 %v2329
    %2683 = vmatpush.bf16.msra.mxu0 %v2323
    %2684 = vmatpush.bf16.msra.mxu0 %v2317
    %2685 = vmatpush.bf16.msra.mxu0 %v2311
    %2686 = vmatpush.bf16.msra.mxu0 %v2305
    %2687 = vmatpush.bf16.msra.mxu0 %v2299
    %2688 = vmatmul.bf16.gmra.mxu0 %v1384
    %v2689 = vpop.f32.mrf.mxu0
    %v2690 = vadd.f32 %v2677, %v2689
    %v2691 = vpop.f32.mrf.mxu0
    %2692 = vdwg.mxu0
    %2693 = vmatpush.bf16.msra.mxu0 %v2198
    %2694 = vmatpush.bf16.msra.mxu0 %v2192
    %2695 = vmatpush.bf16.msra.mxu0 %v2186
    %2696 = vmatpush.bf16.msra.mxu0 %v2180
    %2697 = vmatpush.bf16.msra.mxu0 %v2174
    %2698 = vmatpush.bf16.msra.mxu0 %v2168
    %2699 = vmatpush.bf16.msra.mxu0 %v2162
    %2700 = vmatpush.bf16.msra.mxu0 %v2156
    %2701 = vmatmul.bf16.gmra.mxu0 %v1381
    %v2702 = vpop.f32.mrf.mxu0
    %v2703 = vadd.f32 0.0, %v2702
    %v2704 = vpop.f32.mrf.mxu0
    %2705 = vdwg.mxu0
    %2706 = vmatpush.bf16.msra.mxu0 %v2246
    %2707 = vmatpush.bf16.msra.mxu0 %v2240
    %2708 = vmatpush.bf16.msra.mxu0 %v2234
    %2709 = vmatpush.bf16.msra.mxu0 %v2228
    %2710 = vmatpush.bf16.msra.mxu0 %v2222
    %2711 = vmatpush.bf16.msra.mxu0 %v2216
    %2712 = vmatpush.bf16.msra.mxu0 %v2210
    %2713 = vmatpush.bf16.msra.mxu0 %v2204
    %2714 = vmatmul.bf16.gmra.mxu0 %v1382
    %v2715 = vpop.f32.mrf.mxu0
    %v2716 = vadd.f32 %v2703, %v2715
    %v2717 = vpop.f32.mrf.mxu0
    %2718 = vdwg.mxu0
    %2719 = vmatpush.bf16.msra.mxu0 %v2294
    %2720 = vmatpush.bf16.msra.mxu0 %v2288
    %2721 = vmatpush.bf16.msra.mxu0 %v2282
    %2722 = vmatpush.bf16.msra.mxu0 %v2276
    %2723 = vmatpush.bf16.msra.mxu0 %v2270
    %2724 = vmatpush.bf16.msra.mxu0 %v2264
    %2725 = vmatpush.bf16.msra.mxu0 %v2258
    %2726 = vmatpush.bf16.msra.mxu0 %v2252
    %2727 = vmatmul.bf16.gmra.mxu0 %v1383
    %v2728 = vpop.f32.mrf.mxu0
    %v2729 = vadd.f32 %v2716, %v2728
    %v2730 = vpop.f32.mrf.mxu0
    %2731 = vdwg.mxu0
    %2732 = vmatpush.bf16.msra.mxu0 %v2342
    %2733 = vmatpush.bf16.msra.mxu0 %v2336
    %2734 = vmatpush.bf16.msra.mxu0 %v2330
    %2735 = vmatpush.bf16.msra.mxu0 %v2324
    %2736 = vmatpush.bf16.msra.mxu0 %v2318
    %2737 = vmatpush.bf16.msra.mxu0 %v2312
    %2738 = vmatpush.bf16.msra.mxu0 %v2306
    %2739 = vmatpush.bf16.msra.mxu0 %v2300
    %2740 = vmatmul.bf16.gmra.mxu0 %v1384
    %v2741 = vpop.f32.mrf.mxu0
    %v2742 = vadd.f32 %v2729, %v2741
    %v2743 = vpop.f32.mrf.mxu0
    %2744 = vdwg.mxu0
    %2745 = vmatpush.bf16.msra.mxu0 %v2199
    %2746 = vmatpush.bf16.msra.mxu0 %v2193
    %2747 = vmatpush.bf16.msra.mxu0 %v2187
    %2748 = vmatpush.bf16.msra.mxu0 %v2181
    %2749 = vmatpush.bf16.msra.mxu0 %v2175
    %2750 = vmatpush.bf16.msra.mxu0 %v2169
    %2751 = vmatpush.bf16.msra.mxu0 %v2163
    %2752 = vmatpush.bf16.msra.mxu0 %v2157
    %2753 = vmatmul.bf16.gmra.mxu0 %v1381
    %v2754 = vpop.f32.mrf.mxu0
    %v2755 = vadd.f32 0.0, %v2754
    %v2756 = vpop.f32.mrf.mxu0
    %2757 = vdwg.mxu0
    %2758 = vmatpush.bf16.msra.mxu0 %v2247
    %2759 = vmatpush.bf16.msra.mxu0 %v2241
    %2760 = vmatpush.bf16.msra.mxu0 %v2235
    %2761 = vmatpush.bf16.msra.mxu0 %v2229
    %2762 = vmatpush.bf16.msra.mxu0 %v2223
    %2763 = vmatpush.bf16.msra.mxu0 %v2217
    %2764 = vmatpush.bf16.msra.mxu0 %v2211
    %2765 = vmatpush.bf16.msra.mxu0 %v2205
    %2766 = vmatmul.bf16.gmra.mxu0 %v1382
    %v2767 = vpop.f32.mrf.mxu0
    %v2768 = vadd.f32 %v2755, %v2767
    %v2769 = vpop.f32.mrf.mxu0
    %2770 = vdwg.mxu0
    %2771 = vmatpush.bf16.msra.mxu0 %v2295
    %2772 = vmatpush.bf16.msra.mxu0 %v2289
    %2773 = vmatpush.bf16.msra.mxu0 %v2283
    %2774 = vmatpush.bf16.msra.mxu0 %v2277
    %2775 = vmatpush.bf16.msra.mxu0 %v2271
    %2776 = vmatpush.bf16.msra.mxu0 %v2265
    %2777 = vmatpush.bf16.msra.mxu0 %v2259
    %2778 = vmatpush.bf16.msra.mxu0 %v2253
    %2779 = vmatmul.bf16.gmra.mxu0 %v1383
    %v2780 = vpop.f32.mrf.mxu0
    %v2781 = vadd.f32 %v2768, %v2780
    %v2782 = vpop.f32.mrf.mxu0
    %2783 = vdwg.mxu0
    %2784 = vmatpush.bf16.msra.mxu0 %v2343
    %2785 = vmatpush.bf16.msra.mxu0 %v2337
    %2786 = vmatpush.bf16.msra.mxu0 %v2331
    %2787 = vmatpush.bf16.msra.mxu0 %v2325
    %2788 = vmatpush.bf16.msra.mxu0 %v2319
    %2789 = vmatpush.bf16.msra.mxu0 %v2313
    %2790 = vmatpush.bf16.msra.mxu0 %v2307
    %2791 = vmatpush.bf16.msra.mxu0 %v2301
    %2792 = vmatmul.bf16.gmra.mxu0 %v1384
    %v2793 = vpop.f32.mrf.mxu0
    %v2794 = vadd.f32 %v2781, %v2793
    %v2795 = vpop.f32.mrf.mxu0
    %2796 = vdwg.mxu0
    %2797 = vmatpush.bf16.msra.mxu0 %v2200
    %2798 = vmatpush.bf16.msra.mxu0 %v2194
    %2799 = vmatpush.bf16.msra.mxu0 %v2188
    %2800 = vmatpush.bf16.msra.mxu0 %v2182
    %2801 = vmatpush.bf16.msra.mxu0 %v2176
    %2802 = vmatpush.bf16.msra.mxu0 %v2170
    %2803 = vmatpush.bf16.msra.mxu0 %v2164
    %2804 = vmatpush.bf16.msra.mxu0 %v2158
    %2805 = vmatmul.bf16.gmra.mxu0 %v1381
    %v2806 = vpop.f32.mrf.mxu0
    %v2807 = vadd.f32 0.0, %v2806
    %v2808 = vpop.f32.mrf.mxu0
    %2809 = vdwg.mxu0
    %2810 = vmatpush.bf16.msra.mxu0 %v2248
    %2811 = vmatpush.bf16.msra.mxu0 %v2242
    %2812 = vmatpush.bf16.msra.mxu0 %v2236
    %2813 = vmatpush.bf16.msra.mxu0 %v2230
    %2814 = vmatpush.bf16.msra.mxu0 %v2224
    %2815 = vmatpush.bf16.msra.mxu0 %v2218
    %2816 = vmatpush.bf16.msra.mxu0 %v2212
    %2817 = vmatpush.bf16.msra.mxu0 %v2206
    %2818 = vmatmul.bf16.gmra.mxu0 %v1382
    %v2819 = vpop.f32.mrf.mxu0
    %v2820 = vadd.f32 %v2807, %v2819
    %v2821 = vpop.f32.mrf.mxu0
    %2822 = vdwg.mxu0
    %2823 = vmatpush.bf16.msra.mxu0 %v2296
    %2824 = vmatpush.bf16.msra.mxu0 %v2290
    %2825 = vmatpush.bf16.msra.mxu0 %v2284
    %2826 = vmatpush.bf16.msra.mxu0 %v2278
    %2827 = vmatpush.bf16.msra.mxu0 %v2272
    %2828 = vmatpush.bf16.msra.mxu0 %v2266
    %2829 = vmatpush.bf16.msra.mxu0 %v2260
    %2830 = vmatpush.bf16.msra.mxu0 %v2254
    %2831 = vmatmul.bf16.gmra.mxu0 %v1383
    %v2832 = vpop.f32.mrf.mxu0
    %v2833 = vadd.f32 %v2820, %v2832
    %v2834 = vpop.f32.mrf.mxu0
    %2835 = vdwg.mxu0
    %2836 = vmatpush.bf16.msra.mxu0 %v2344
    %2837 = vmatpush.bf16.msra.mxu0 %v2338
    %2838 = vmatpush.bf16.msra.mxu0 %v2332
    %2839 = vmatpush.bf16.msra.mxu0 %v2326
    %2840 = vmatpush.bf16.msra.mxu0 %v2320
    %2841 = vmatpush.bf16.msra.mxu0 %v2314
    %2842 = vmatpush.bf16.msra.mxu0 %v2308
    %2843 = vmatpush.bf16.msra.mxu0 %v2302
    %2844 = vmatmul.bf16.gmra.mxu0 %v1384
    %v2845 = vpop.f32.mrf.mxu0
    %v2846 = vadd.f32 %v2833, %v2845
    %v2847 = vpop.f32.mrf.mxu0
    %2848 = vdwg.mxu0
    %v2849 = vtanh.pop %v2586
    %v2850 = vtanh.pop %v2638
    %v2851 = vtanh.pop %v2690
    %v2852 = vtanh.pop %v2742
    %v2853 = vtanh.pop %v2794
    %v2854 = vtanh.pop %v2846
    %v2861 = vrot.slane %v2850, 6
    %v2862 = vrot.slane %v2851, 4
    %v2863 = vrot.slane %v2852, 2
    %v2864 = vrot.slane %v2854, 6
    %v2865 = vsel %vm103, %v2849, %v2861
    %vm2866 = vcmask 1045508
    %v2867 = vsel %vm2866, %v2862, %v2863
    %vm2868 = vcmask 1043456
    %v2869 = vsel %vm2868, %v2865, %v2867
    %v2870 = vsel %vm103, %v2853, %v2864
    %2873 = vst [vmem:[#allocation5] sm:$0xff] %v2869
    %2874 = vst [vmem:[#allocation5 + $0x8] sm:$0xf] %v2870
    // Predicated region
    $region54: #{tpu_custom_call.1} parent=1 // pred_check
      _
    $region55: #{tpu_custom_call.1} parent=1 // pred_check_branch
      %2876 = sbr.rel (0) target = $region57
    $region56: #{tpu_custom_call.1} parent=1 // pred_region
      %2878 = vsyncadd [#allocation4], 0
      %s2880 = sshll.u32 [#allocation5], 4
      %s2881 = int_to_ptr.vmem [resolvable:$true] %s2880
      %s2882 = sshll.u32 %s12, 4
      %s2883 = int_to_ptr.hbm [resolvable:$true] %s2882
      %2885 = dma.vmem_to_hbm [thread:$0]  %s2881, 192, %s2883, [#allocation4]
    $region57: #{tpu_custom_call.1} parent=1 // pred_fallthru
      _
    // Predicated region
    $region58: #{tpu_custom_call.1} parent=1 // pred_check
      _
    $region59: #{tpu_custom_call.1} parent=1 // pred_check_branch
      %2887 = sbr.rel (0) target = $region61
    $region60: #{tpu_custom_call.1} parent=1 // pred_region
      %2889 = dma.done [#allocation4], 192
    $region61: #{tpu_custom_call.1} parent=1 // pred_fallthru
      _
    %2890 = vsyncpa [#allocation3], 1
    %2891 = vsyncpa [#allocation4], 1

</llo_original>
